<compile_context>
chip_gen: v6e
topology: v6e:2x2x1
jax: 0.10.0
libtpu: 0.0.40
codegen_flags: <defaults>
</compile_context>

<pallas_src>
import functools

import jax
import jax.numpy as jnp
from jax import lax
from jax.experimental import pallas as pl
from jax.experimental.pallas import tpu as pltpu


def _local_attention_kernel(x_ref, wqkv_ref, wo_ref, bo_ref, y_ref, *,
                            heads, dim_head, patch, batch_block):
    inner = heads * dim_head
    L = x_ref.shape[2]
    nwin = L // patch

    # Loop-invariant weight loads (hoisted out of the batch loop).
    w_qkv = wqkv_ref[...]          # (dim, 3*inner) bf16, scale folded into q columns
    w_o = wo_ref[...]              # (dim, inner)   bf16
    b_o = bo_ref[...]              # (dim, 1)       f32

    # TODO(synk): at production heads / batch_block counts convert these small Python
    # loops to lax.fori_loop to bound live ranges; at bb<=2 / heads<=4 unrolling is neutral.
    for i in range(batch_block):
        # Fused QKV projection: one (L, dim) @ (dim, 3*inner) MXU matmul per batch element.
        x_t = jnp.transpose(x_ref[i])                                      # (L, dim), tiny XLU transpose
        qkv = jnp.dot(x_t, w_qkv,
                      preferred_element_type=jnp.float32).astype(jnp.bfloat16)  # (L, 3*inner)

        # Window relayout: (L, 3*inner) -> (nwin, patch, 3*inner) via static sublane
        # slices + stack (avoids a reshape that splits the sublane dim by patch=7).
        # TODO(synk): for long sequences make the window axis a fori_loop / grid axis
        # instead of unrolling nwin slices here.
        qkv_w = jnp.stack([qkv[w * patch:(w + 1) * patch, :] for w in range(nwin)],
                          axis=0)                                           # (nwin, p, 3*inner)

        head_outs = []
        for h in range(heads):
            lo = h * dim_head
            q = qkv_w[:, :, lo:lo + dim_head]                               # (nwin, p, d) bf16
            k = qkv_w[:, :, inner + lo:inner + lo + dim_head]
            v = qkv_w[:, :, 2 * inner + lo:2 * inner + lo + dim_head]

            # Per-window attention: (nwin, p, p) scores — no (L, L) temporaries, no mask.
            s = jnp.einsum('wid,wjd->wij', q, k,
                           preferred_element_type=jnp.float32)              # f32 softmax math
            s = s - jnp.max(s, axis=-1, keepdims=True)
            e = jnp.exp(s)
            attn = (e * pl.reciprocal(jnp.sum(e, axis=-1, keepdims=True), approx=True)
                    ).astype(jnp.bfloat16)
            # TODO(synk): attention dropout is identity for dropout=0.0 (inference).
            head_outs.append(
                jnp.einsum('wij,wjd->wid', attn, v,
                           preferred_element_type=jnp.float32).astype(jnp.bfloat16))

        o_all = jnp.concatenate(head_outs, axis=-1)                         # (nwin, p, inner) head-major
        o_flat = jnp.concatenate([o_all[w] for w in range(nwin)], axis=0)   # (L, inner), seq order

        # Output 1x1 conv in one matmul, directly in native (dim, L) layout: y = Wo @ O^T + b.
        y_nat = lax.dot_general(w_o, o_flat, (((1,), (1,)), ((), ())),
                                preferred_element_type=jnp.float32)         # (dim, L)
        y_ref[i] = (y_nat + b_o).astype(y_ref.dtype)


def _pick_batch_block(B, dim, L, out_itemsize):
    """Moderate batch block: enough per-step work to amortize the ~0.35us grid-step
    overhead, but >= min(B, 4) grid steps so BlockSpec double-buffering overlaps the x
    load / y writeback with compute (and both v7x TensorCores get work), while the
    double-buffered x/y blocks stay far below v7x's 64 MiB VMEM."""
    budget = 8 << 20
    per_elem = dim * L * 2 * (2 + out_itemsize)     # bf16 x + out block, double-buffered
    best = 1
    for cand in range(1, B + 1):
        if B % cand != 0:
            continue
        if B // cand < min(B, 4):
            break
        if cand * per_elem > budget:
            break
        best = cand
    return best


def local_attention(x, wq, wkv, wo, bo, *, heads, dim_head, patch, batch_block=None):
    """LocalAttention forward.

    x: (B, dim, L) NCL.  wq: (inner, dim, 1).  wkv: (2*inner, dim, 1).
    wo: (dim, inner, 1).  bo: (dim,).  L must be a multiple of `patch`.
    """
    B, dim, L = x.shape
    inner = heads * dim_head
    assert L % patch == 0, "sequence length must be a multiple of local_patch_size"
    assert wq.shape == (inner, dim, 1) and wkv.shape == (2 * inner, dim, 1)
    assert wo.shape == (dim, inner, 1) and bo.shape == (dim,)
    # TODO(synk): only group=1 (dense 1x1 convs, the module default) is implemented.
    # TODO(synk): L=56 (< 128) lane-pads every (., L) block; if the model's L is
    # configurable, a multiple of 128 makes the stores unmasked / lane-dense.

    cdt = jnp.bfloat16
    scale = float(dim_head) ** -0.5

    # One fused, lane-dense projection weight (dim, 3*inner) = [Wq^T*scale | Wk^T | Wv^T];
    # scale folded in f32 before the bf16 cast.
    wq_t = (wq[:, :, 0].astype(jnp.float32) * scale).T
    wk_t = wkv[:inner, :, 0].astype(jnp.float32).T
    wv_t = wkv[inner:, :, 0].astype(jnp.float32).T
    wqkv_t = jnp.concatenate([wq_t, wk_t, wv_t], axis=1).astype(cdt)        # (dim, 3*inner)
    wo2 = wo[:, :, 0].astype(cdt)                                           # (dim, inner)
    bo2 = bo.reshape(dim, 1).astype(jnp.float32)
    x_c = x.astype(cdt)                                                     # native NCL, bf16 DMA

    if batch_block is None:
        batch_block = _pick_batch_block(B, dim, L, x.dtype.itemsize)
    assert B % batch_block == 0

    kernel = functools.partial(_local_attention_kernel, heads=heads, dim_head=dim_head,
                               patch=patch, batch_block=batch_block)

    grid = (B // batch_block,)
    flops = B * (8 * L * dim * inner + 4 * L * inner * patch)
    transcendentals = B * heads * L * (patch + 1)
    bytes_accessed = (B * dim * L * (2 + x.dtype.itemsize)
                      + 4 * inner * dim * 2 + dim * 4)

    # Explicit VMEM budget (v7x: 64 MiB physical, 32 MiB scoped default): double-buffered
    # x/y blocks + weights + generous headroom for in-kernel temporaries.
    vmem_est = (2 * batch_block * dim * L * (2 + x.dtype.itemsize)
                + 4 * inner * dim * 2 + dim * 4
                + 16 * batch_block * L * max(3 * inner, dim) * 4)
    vmem_limit = int(min(56 << 20, max(32 << 20, 2 * vmem_est)))

    operands = (x_c, wqkv_t, wo2, bo2)
    y = pl.pallas_call(
        kernel,
        out_shape=jax.ShapeDtypeStruct((B, dim, L), x.dtype),
        grid_spec=pltpu.PrefetchScalarGridSpec(
            num_scalar_prefetch=0,
            grid=grid,
            in_specs=[
                pl.BlockSpec((batch_block, dim, L), lambda b: (b, 0, 0)),
                pl.BlockSpec((dim, 3 * inner), lambda b: (0, 0)),
                pl.BlockSpec((dim, inner), lambda b: (0, 0)),
                pl.BlockSpec((dim, 1), lambda b: (0, 0)),
            ],
            out_specs=pl.BlockSpec((batch_block, dim, L), lambda b: (b, 0, 0)),
        ),
        compiler_params=pltpu.CompilerParams(
            dimension_semantics=("parallel",),
            allow_input_fusion=tuple(True for _ in operands),
            vmem_limit_bytes=vmem_limit,
        ),
        cost_estimate=pl.CostEstimate(flops=flops, transcendentals=transcendentals,
                                      bytes_accessed=bytes_accessed),
    )(*operands)
    return y


def _reference(x, wq, wkv, wo, bo, *, heads, dim_head, patch):
    """Pure-JAX mirror of the PyTorch LocalAttention.forward (group=1, dropout identity)."""
    B, dim, L = x.shape
    inner = heads * dim_head
    nwin = L // patch
    q = jnp.einsum('od,bdl->bol', wq[:, :, 0], x)                       # (B, inner, L)
    kv = jnp.einsum('od,bdl->bol', wkv[:, :, 0], x)                     # (B, 2*inner, L)
    k_, v_ = kv[:, :inner], kv[:, inner:]

    def split(t):   # (B, inner, L) -> (B*nwin*heads, patch, dim_head)
        t = t.reshape(B, heads, dim_head, nwin, patch)
        t = t.transpose(0, 3, 1, 4, 2)                                   # (B, nwin, heads, p, d)
        return t.reshape(B * nwin * heads, patch, dim_head)

    qh, kh, vh = split(q), split(k_), split(v_)
    dots = jnp.einsum('bid,bjd->bij', qh, kh) * (dim_head ** -0.5)
    attn = jax.nn.softmax(dots, axis=-1)
    out = jnp.einsum('bij,bjd->bid', attn, vh)                           # (B*nwin*heads, p, d)
    out = out.reshape(B, nwin, heads, patch, dim_head)
    out = out.transpose(0, 2, 4, 1, 3).reshape(B, inner, L)              # 'b (h d) (l p)'
    return jnp.einsum('oi,bil->bol', wo[:, :, 0], out) + bo[None, :, None]


if __name__ == "__main__":
    # Small shapes consistent with the module (local_patch_size = 7 default).
    B, dim, L = 2, 32, 56
    heads, dim_head, patch = 2, 8, 7
    inner = heads * dim_head

    key = jax.random.PRNGKey(0)
    kx, kq, kkv, ko, kb = jax.random.split(key, 5)

    def q16(a):   # snap values to the bf16 grid so the f32 reference matches the bf16 MXU path
        return a.astype(jnp.bfloat16).astype(jnp.float32)

    x = q16(jax.random.normal(kx, (B, dim, L), dtype=jnp.float32))
    wq = q16(0.1 * jax.random.normal(kq, (inner, dim, 1), dtype=jnp.float32))
    wkv = q16(0.1 * jax.random.normal(kkv, (2 * inner, dim, 1), dtype=jnp.float32))
    wo = q16(0.1 * jax.random.normal(ko, (dim, inner, 1), dtype=jnp.float32))
    bo = q16(0.1 * jax.random.normal(kb, (dim,), dtype=jnp.float32))

    y_ref = _reference(x, wq, wkv, wo, bo, heads=heads, dim_head=dim_head, patch=patch)

    # None -> auto-picked moderate batch_block (pipelined grid); B -> single grid step.
    for bb in (None, B):
        fn = jax.jit(functools.partial(local_attention, heads=heads, dim_head=dim_head,
                                       patch=patch, batch_block=bb))
        y = jax.block_until_ready(fn(x, wq, wkv, wo, bo))
        assert y.shape == (B, dim, L)
        err = float(jnp.max(jnp.abs(y - y_ref)))
        assert err < 2e-2, f"batch_block={bb}: max abs err {err}"

    print("KERNEL_OK")
</pallas_src>

<mosaic_0001>
module attributes {stable_mosaic.version = 11 : i64} {
  func.func @_local_attention_kernel(%arg0: i32, %arg1: memref<1x32x56xbf16, #tpu.memory_space<vmem>>, %arg2: memref<32x48xbf16, #tpu.memory_space<vmem>>, %arg3: memref<32x16xbf16, #tpu.memory_space<vmem>>, %arg4: memref<32x1xf32, #tpu.memory_space<vmem>>, %arg5: memref<1x32x56xf32, #tpu.memory_space<vmem>>) attributes {dimension_semantics = [#tpu.dimension_semantics<parallel>], iteration_bounds = array<i64: 2>, scalar_prefetch = 0 : i64, scratch_operands = 0 : i64, tpu.core_type = #tpu.core_type<tc>, window_params = [{transform_indices = @transform_0, window_bounds = array<i64: 1, 32, 56>}, {pipeline_mode = #tpu.pipeline_mode<synchronous>, transform_indices = @transform_1, window_bounds = array<i64: 32, 48>}, {pipeline_mode = #tpu.pipeline_mode<synchronous>, transform_indices = @transform_2, window_bounds = array<i64: 32, 16>}, {pipeline_mode = #tpu.pipeline_mode<synchronous>, transform_indices = @transform_3, window_bounds = array<i64: 32, 1>}, {transform_indices = @transform_4, window_bounds = array<i64: 1, 32, 56>}]} {
    %c0 = arith.constant 0 : index
    %c0_0 = arith.constant 0 : index
    %0 = vector.load %arg2[%c0, %c0_0] : memref<32x48xbf16, #tpu.memory_space<vmem>>, vector<32x48xbf16>
    %c0_1 = arith.constant 0 : index
    %c0_2 = arith.constant 0 : index
    %1 = vector.load %arg3[%c0_1, %c0_2] : memref<32x16xbf16, #tpu.memory_space<vmem>>, vector<32x16xbf16>
    %c0_3 = arith.constant 0 : index
    %c0_4 = arith.constant 0 : index
    %2 = vector.load %arg4[%c0_3, %c0_4] : memref<32x1xf32, #tpu.memory_space<vmem>>, vector<32x1xf32>
    %c0_5 = arith.constant 0 : index
    %c0_6 = arith.constant 0 : index
    %c0_7 = arith.constant 0 : index
    %3 = vector.load %arg1[%c0_5, %c0_6, %c0_7] : memref<1x32x56xbf16, #tpu.memory_space<vmem>>, vector<1x32x56xbf16>
    %4 = vector.shape_cast %3 : vector<1x32x56xbf16> to vector<32x56xbf16>
    %5 = tpu.transpose %4, [1, 0] : vector<32x56xbf16> -> vector<56x32xbf16>
    %cst = arith.constant dense<0.000000e+00> : vector<56x48xf32>
    %6 = tpu.matmul %5, %0, %cst {dimension_numbers = #tpu.dot_dimension_numbers<[1], [0], [0], [1], [0, 0, 1, 1], [], []>} : vector<56x32xbf16>, vector<32x48xbf16>, vector<56x48xf32> -> vector<56x48xf32>
    %7 = arith.truncf %6 : vector<56x48xf32> to vector<56x48xbf16>
    %8 = vector.extract_strided_slice %7 {offsets = [0, 0], sizes = [7, 48], strides = [1, 1]} : vector<56x48xbf16> to vector<7x48xbf16>
    %9 = vector.extract_strided_slice %7 {offsets = [7, 0], sizes = [7, 48], strides = [1, 1]} : vector<56x48xbf16> to vector<7x48xbf16>
    %10 = vector.extract_strided_slice %7 {offsets = [14, 0], sizes = [7, 48], strides = [1, 1]} : vector<56x48xbf16> to vector<7x48xbf16>
    %11 = vector.extract_strided_slice %7 {offsets = [21, 0], sizes = [7, 48], strides = [1, 1]} : vector<56x48xbf16> to vector<7x48xbf16>
    %12 = vector.extract_strided_slice %7 {offsets = [28, 0], sizes = [7, 48], strides = [1, 1]} : vector<56x48xbf16> to vector<7x48xbf16>
    %13 = vector.extract_strided_slice %7 {offsets = [35, 0], sizes = [7, 48], strides = [1, 1]} : vector<56x48xbf16> to vector<7x48xbf16>
    %14 = vector.extract_strided_slice %7 {offsets = [42, 0], sizes = [7, 48], strides = [1, 1]} : vector<56x48xbf16> to vector<7x48xbf16>
    %15 = vector.extract_strided_slice %7 {offsets = [49, 0], sizes = [7, 48], strides = [1, 1]} : vector<56x48xbf16> to vector<7x48xbf16>
    %16 = vector.shape_cast %8 : vector<7x48xbf16> to vector<1x7x48xbf16>
    %17 = vector.shape_cast %9 : vector<7x48xbf16> to vector<1x7x48xbf16>
    %18 = vector.shape_cast %10 : vector<7x48xbf16> to vector<1x7x48xbf16>
    %19 = vector.shape_cast %11 : vector<7x48xbf16> to vector<1x7x48xbf16>
    %20 = vector.shape_cast %12 : vector<7x48xbf16> to vector<1x7x48xbf16>
    %21 = vector.shape_cast %13 : vector<7x48xbf16> to vector<1x7x48xbf16>
    %22 = vector.shape_cast %14 : vector<7x48xbf16> to vector<1x7x48xbf16>
    %23 = vector.shape_cast %15 : vector<7x48xbf16> to vector<1x7x48xbf16>
    %24 = tpu.concatenate %16, %17, %18, %19, %20, %21, %22, %23 in 0 : vector<1x7x48xbf16>, vector<1x7x48xbf16>, vector<1x7x48xbf16>, vector<1x7x48xbf16>, vector<1x7x48xbf16>, vector<1x7x48xbf16>, vector<1x7x48xbf16>, vector<1x7x48xbf16> -> vector<8x7x48xbf16>
    %25 = vector.extract_strided_slice %24 {offsets = [0, 0, 0], sizes = [8, 7, 8], strides = [1, 1, 1]} : vector<8x7x48xbf16> to vector<8x7x8xbf16>
    %26 = vector.extract_strided_slice %24 {offsets = [0, 0, 16], sizes = [8, 7, 8], strides = [1, 1, 1]} : vector<8x7x48xbf16> to vector<8x7x8xbf16>
    %27 = vector.extract_strided_slice %24 {offsets = [0, 0, 32], sizes = [8, 7, 8], strides = [1, 1, 1]} : vector<8x7x48xbf16> to vector<8x7x8xbf16>
    "tpu.trace_start"() <{level = 10 : i32, message = "wid,wjd->wij"}> : () -> ()
    %cst_8 = arith.constant dense<0.000000e+00> : vector<8x7x7xf32>
    %28 = tpu.matmul %25, %26, %cst_8 {dimension_numbers = #tpu.dot_dimension_numbers<[2], [2], [1], [1], [0, 0, 0, 1, 1, 1], [0], [0]>} : vector<8x7x8xbf16>, vector<8x7x8xbf16>, vector<8x7x7xf32> -> vector<8x7x7xf32>
    "tpu.trace_stop"() : () -> ()
    %cst_9 = arith.constant dense<0xFF800000> : vector<8x7xf32>
    %29 = vector.multi_reduction <maximumf>, %28, %cst_9 [2] : vector<8x7x7xf32> to vector<8x7xf32>
    %30 = vector.shape_cast %29 : vector<8x7xf32> to vector<8x7x1xf32>
    %31 = vector.broadcast %30 : vector<8x7x1xf32> to vector<8x7x7xf32>
    %32 = arith.subf %28, %31 : vector<8x7x7xf32>
    %33 = math.exp %32 : vector<8x7x7xf32>
    %cst_10 = arith.constant dense<0.000000e+00> : vector<8x7xf32>
    %34 = vector.multi_reduction <add>, %33, %cst_10 [2] : vector<8x7x7xf32> to vector<8x7xf32>
    %35 = vector.shape_cast %34 : vector<8x7xf32> to vector<8x7x1xf32>
    %36 = tpu.reciprocal %35 {approx = true} : vector<8x7x1xf32> -> vector<8x7x1xf32>
    %37 = vector.broadcast %36 : vector<8x7x1xf32> to vector<8x7x7xf32>
    %38 = arith.mulf %33, %37 : vector<8x7x7xf32>
    %39 = arith.truncf %38 : vector<8x7x7xf32> to vector<8x7x7xbf16>
    "tpu.trace_start"() <{level = 10 : i32, message = "wij,wjd->wid"}> : () -> ()
    %cst_11 = arith.constant dense<0.000000e+00> : vector<8x7x8xf32>
    %40 = tpu.matmul %39, %27, %cst_11 {dimension_numbers = #tpu.dot_dimension_numbers<[2], [1], [1], [2], [0, 0, 0, 1, 1, 2], [0], [0]>} : vector<8x7x7xbf16>, vector<8x7x8xbf16>, vector<8x7x8xf32> -> vector<8x7x8xf32>
    "tpu.trace_stop"() : () -> ()
    %41 = arith.truncf %40 : vector<8x7x8xf32> to vector<8x7x8xbf16>
    %42 = vector.extract_strided_slice %24 {offsets = [0, 0, 8], sizes = [8, 7, 8], strides = [1, 1, 1]} : vector<8x7x48xbf16> to vector<8x7x8xbf16>
    %43 = vector.extract_strided_slice %24 {offsets = [0, 0, 24], sizes = [8, 7, 8], strides = [1, 1, 1]} : vector<8x7x48xbf16> to vector<8x7x8xbf16>
    %44 = vector.extract_strided_slice %24 {offsets = [0, 0, 40], sizes = [8, 7, 8], strides = [1, 1, 1]} : vector<8x7x48xbf16> to vector<8x7x8xbf16>
    "tpu.trace_start"() <{level = 10 : i32, message = "wid,wjd->wij"}> : () -> ()
    %cst_12 = arith.constant dense<0.000000e+00> : vector<8x7x7xf32>
    %45 = tpu.matmul %42, %43, %cst_12 {dimension_numbers = #tpu.dot_dimension_numbers<[2], [2], [1], [1], [0, 0, 0, 1, 1, 1], [0], [0]>} : vector<8x7x8xbf16>, vector<8x7x8xbf16>, vector<8x7x7xf32> -> vector<8x7x7xf32>
    "tpu.trace_stop"() : () -> ()
    %cst_13 = arith.constant dense<0xFF800000> : vector<8x7xf32>
    %46 = vector.multi_reduction <maximumf>, %45, %cst_13 [2] : vector<8x7x7xf32> to vector<8x7xf32>
    %47 = vector.shape_cast %46 : vector<8x7xf32> to vector<8x7x1xf32>
    %48 = vector.broadcast %47 : vector<8x7x1xf32> to vector<8x7x7xf32>
    %49 = arith.subf %45, %48 : vector<8x7x7xf32>
    %50 = math.exp %49 : vector<8x7x7xf32>
    %cst_14 = arith.constant dense<0.000000e+00> : vector<8x7xf32>
    %51 = vector.multi_reduction <add>, %50, %cst_14 [2] : vector<8x7x7xf32> to vector<8x7xf32>
    %52 = vector.shape_cast %51 : vector<8x7xf32> to vector<8x7x1xf32>
    %53 = tpu.reciprocal %52 {approx = true} : vector<8x7x1xf32> -> vector<8x7x1xf32>
    %54 = vector.broadcast %53 : vector<8x7x1xf32> to vector<8x7x7xf32>
    %55 = arith.mulf %50, %54 : vector<8x7x7xf32>
    %56 = arith.truncf %55 : vector<8x7x7xf32> to vector<8x7x7xbf16>
    "tpu.trace_start"() <{level = 10 : i32, message = "wij,wjd->wid"}> : () -> ()
    %cst_15 = arith.constant dense<0.000000e+00> : vector<8x7x8xf32>
    %57 = tpu.matmul %56, %44, %cst_15 {dimension_numbers = #tpu.dot_dimension_numbers<[2], [1], [1], [2], [0, 0, 0, 1, 1, 2], [0], [0]>} : vector<8x7x7xbf16>, vector<8x7x8xbf16>, vector<8x7x8xf32> -> vector<8x7x8xf32>
    "tpu.trace_stop"() : () -> ()
    %58 = arith.truncf %57 : vector<8x7x8xf32> to vector<8x7x8xbf16>
    %59 = tpu.concatenate %41, %58 in 2 : vector<8x7x8xbf16>, vector<8x7x8xbf16> -> vector<8x7x16xbf16>
    %60 = vector.extract_strided_slice %59 {offsets = [0, 0, 0], sizes = [1, 7, 16], strides = [1, 1, 1]} : vector<8x7x16xbf16> to vector<1x7x16xbf16>
    %61 = vector.shape_cast %60 : vector<1x7x16xbf16> to vector<7x16xbf16>
    %62 = vector.extract_strided_slice %59 {offsets = [1, 0, 0], sizes = [1, 7, 16], strides = [1, 1, 1]} : vector<8x7x16xbf16> to vector<1x7x16xbf16>
    %63 = vector.shape_cast %62 : vector<1x7x16xbf16> to vector<7x16xbf16>
    %64 = vector.extract_strided_slice %59 {offsets = [2, 0, 0], sizes = [1, 7, 16], strides = [1, 1, 1]} : vector<8x7x16xbf16> to vector<1x7x16xbf16>
    %65 = vector.shape_cast %64 : vector<1x7x16xbf16> to vector<7x16xbf16>
    %66 = vector.extract_strided_slice %59 {offsets = [3, 0, 0], sizes = [1, 7, 16], strides = [1, 1, 1]} : vector<8x7x16xbf16> to vector<1x7x16xbf16>
    %67 = vector.shape_cast %66 : vector<1x7x16xbf16> to vector<7x16xbf16>
    %68 = vector.extract_strided_slice %59 {offsets = [4, 0, 0], sizes = [1, 7, 16], strides = [1, 1, 1]} : vector<8x7x16xbf16> to vector<1x7x16xbf16>
    %69 = vector.shape_cast %68 : vector<1x7x16xbf16> to vector<7x16xbf16>
    %70 = vector.extract_strided_slice %59 {offsets = [5, 0, 0], sizes = [1, 7, 16], strides = [1, 1, 1]} : vector<8x7x16xbf16> to vector<1x7x16xbf16>
    %71 = vector.shape_cast %70 : vector<1x7x16xbf16> to vector<7x16xbf16>
    %72 = vector.extract_strided_slice %59 {offsets = [6, 0, 0], sizes = [1, 7, 16], strides = [1, 1, 1]} : vector<8x7x16xbf16> to vector<1x7x16xbf16>
    %73 = vector.shape_cast %72 : vector<1x7x16xbf16> to vector<7x16xbf16>
    %74 = vector.extract_strided_slice %59 {offsets = [7, 0, 0], sizes = [1, 7, 16], strides = [1, 1, 1]} : vector<8x7x16xbf16> to vector<1x7x16xbf16>
    %75 = vector.shape_cast %74 : vector<1x7x16xbf16> to vector<7x16xbf16>
    %76 = tpu.concatenate %61, %63, %65, %67, %69, %71, %73, %75 in 0 : vector<7x16xbf16>, vector<7x16xbf16>, vector<7x16xbf16>, vector<7x16xbf16>, vector<7x16xbf16>, vector<7x16xbf16>, vector<7x16xbf16>, vector<7x16xbf16> -> vector<56x16xbf16>
    %cst_16 = arith.constant dense<0.000000e+00> : vector<32x56xf32>
    %77 = tpu.matmul %1, %76, %cst_16 {dimension_numbers = #tpu.dot_dimension_numbers<[1], [1], [0], [0], [0, 0, 1, 0], [], []>} : vector<32x16xbf16>, vector<56x16xbf16>, vector<32x56xf32> -> vector<32x56xf32>
    %78 = vector.broadcast %2 : vector<32x1xf32> to vector<32x56xf32>
    %79 = arith.addf %77, %78 : vector<32x56xf32>
    %c0_17 = arith.constant 0 : index
    %c0_18 = arith.constant 0 : index
    %c0_19 = arith.constant 0 : index
    %80 = vector.load %arg5[%c0_17, %c0_18, %c0_19] : memref<1x32x56xf32, #tpu.memory_space<vmem>>, vector<1x32x56xf32>
    %81 = vector.shape_cast %80 : vector<1x32x56xf32> to vector<32x56xf32>
    %82 = vector.shape_cast %79 : vector<32x56xf32> to vector<1x32x56xf32>
    tpu.vector_store %arg5[%c0_17, %c0_18, %c0_19], %82 {strides = array<i32>} : memref<1x32x56xf32, #tpu.memory_space<vmem>>, vector<1x32x56xf32>,
    return
  }
  func.func @transform_0(%arg0: i32) -> (i32, i32, i32) {
    %c0_i32 = arith.constant 0 : i32
    %c0_i32_0 = arith.constant 0 : i32
    %c0_i32_1 = arith.constant 0 : i32
    return %arg0, %c0_i32, %c0_i32_0 : i32, i32, i32
  }
  func.func @transform_1(%arg0: i32) -> (i32, i32) {
    %c0_i32 = arith.constant 0 : i32
    %c0_i32_0 = arith.constant 0 : i32
    %c0_i32_1 = arith.constant 0 : i32
    return %c0_i32, %c0_i32_0 : i32, i32
  }
  func.func @transform_2(%arg0: i32) -> (i32, i32) {
    %c0_i32 = arith.constant 0 : i32
    %c0_i32_0 = arith.constant 0 : i32
    %c0_i32_1 = arith.constant 0 : i32
    return %c0_i32, %c0_i32_0 : i32, i32
  }
  func.func @transform_3(%arg0: i32) -> (i32, i32) {
    %c0_i32 = arith.constant 0 : i32
    %c0_i32_0 = arith.constant 0 : i32
    %c0_i32_1 = arith.constant 0 : i32
    return %c0_i32, %c0_i32_0 : i32, i32
  }
  func.func @transform_4(%arg0: i32) -> (i32, i32, i32) {
    %c0_i32 = arith.constant 0 : i32
    %c0_i32_0 = arith.constant 0 : i32
    %c0_i32_1 = arith.constant 0 : i32
    return %arg0, %c0_i32, %c0_i32_0 : i32, i32, i32
  }
}

</mosaic_0001>

<llo_original>
// kernel: local_attention.2
$region0: #{local_attention.2}
  #allocation0 [shape = 'u32[]', space=smem, size = 0x4, offset = 0x4, fixed_abs, tag = 'smem constant byte address 0x4 - core index']
  #allocation1 [shape = 'u32[144,128]{1,0:T(1,128)}', space=vmem, size = 0x12000, scoped, tag = 'internal scratch']
  #allocation2 [shape = 'u32[2048]{0}', space=vmem, size = 0x2000, scoped, tag = 'scoped memory for local_attention.2']
  #allocation3 [shape = 'u32[2048]{0}', space=vmem, size = 0x2000, scoped, tag = 'scoped memory for local_attention.2']
  #allocation4 [shape = 'u32[2048]{0}', space=vmem, size = 0x2000, scoped, tag = 'scoped memory for local_attention.2']
  #allocation5 [shape = 'u32[2048]{0}', space=vmem, size = 0x2000, scoped, tag = 'scoped memory for local_attention.2']
  #allocation6 [shape = 'u32[2048]{0}', space=vmem, size = 0x2000, scoped, tag = 'scoped memory for local_attention.2']
  #allocation7 [shape = 'u32[2048]{0}', space=vmem, size = 0x2000, scoped, tag = 'scoped memory for local_attention.2']
  #allocation8 [shape = 'u32[2048]{0}', space=vmem, size = 0x2000, scoped, tag = 'scoped memory for local_attention.2']
  #allocation9 [shape = 'u32[2048]{0}', space=vmem, size = 0x2000, scoped, tag = 'scoped memory for local_attention.2']
  #allocation10 [shape = 'u32[2048]{0}', space=vmem, size = 0x2000, scoped, tag = 'scoped memory for local_attention.2']
  #allocation11 [shape = 'u32[2048]{0}', space=vmem, size = 0x2000, scoped, tag = 'scoped memory for local_attention.2']
  #allocation12 [shape = 'u32[2048]{0}', space=vmem, size = 0x2000, scoped, tag = 'scoped memory for local_attention.2']
  #allocation13 [shape = 'u32[2048]{0}', space=vmem, size = 0x2000, scoped, tag = 'scoped memory for local_attention.2']
  #allocation14 [shape = 'u32[2048]{0}', space=vmem, size = 0x2000, scoped, tag = 'scoped memory for local_attention.2']
  #allocation15 [shape = 'u32[2048]{0}', space=vmem, size = 0x2000, scoped, tag = 'scoped memory for local_attention.2']
  #allocation16 [shape = 'u32[2048]{0}', space=vmem, size = 0x2000, scoped, tag = 'scoped memory for local_attention.2']
  %s0 = inlined_call_operand.vmem [shape: f32[32,1], index: 0, kind: input, shape index: {}]
  %s1 = inlined_call_operand.vmem [shape: f32[2,32,56], index: 1, kind: input, shape index: {}]
  %s2 = inlined_call_operand.vmem [shape: bf16[32,16], index: 2, kind: input, shape index: {}]
  %s3 = inlined_call_operand.<no memory space> [shape: bf16[], index: 3, kind: input, shape index: {}]
  %s4 = inlined_call_operand.vmem [shape: bf16[32,16], index: 4, kind: input, shape index: {}]
  %s5 = inlined_call_operand.vmem [shape: bf16[32,16], index: 5, kind: input, shape index: {}]
  %s6 = inlined_call_operand.vmem [shape: bf16[32,16,1], index: 6, kind: input, shape index: {}]
  %s7 = inlined_call_operand.hbm [shape: f32[2,32,56], index: 7, kind: output, shape index: {}]
  %s8 = sld [smem:[#allocation0]]
  $region57: #{local_attention.2} parent=0
    _
  %s10 = ssub.s32 1, %s8
  %s11 = scalar_select 0, %s10, %s8
  %v12 = vstv %s3
  %v13 = vunpack.i.l.bf16 %v12
  %v15 = vunpack.i.h.bf16 %v12
  %v17 = vstv %s3
  %v18 = vunpack.i.l.bf16 %v17
  %v20 = vunpack.i.h.bf16 %v17
  %v22 = vstv %s3
  %v23 = vunpack.i.l.bf16 %v22
  %v25 = vunpack.i.h.bf16 %v22
  $region1: #{local_attention.2} parent=0
    #allocation17 [shape = 'u8[32768]{0}', space=vmem, size = 0x8000, scoped, tag = 'output window, operand 0']
    #allocation18 [shape = 's32[2]{0}', space=sflag, size = 0x8, scoped, tag = 'scoped memory for local_attention.2']
    %27 = vsyncpa [#allocation18], 0
    %s28 = scalar_lea.sflag [#allocation18], 1
    %29 = vsyncpa %s28, 0
    loop: start=0, step=1, limit=4
    $region2: #{local_attention.2} parent=1 // loop_pre_header
      _
    $region3: #{local_attention.2} parent=1 // loop_header
      %s31 = sphi 0, %s35
      %p32 = scmp.ge.s32.totalorder %s31, 4
      %s41 = sphi 0, %s43
      %s44 = sphi 0, %s41
      %s45 = sphi 0, %s44
      %s61 = sphi 0, %s45
      %s69 = sphi 0, %s71
      %s72 = sphi 0, %s69
      %s73 = sphi 0, %s72
      %s89 = sphi 0, %s73
      %s97 = sphi 0, %s99
      %s100 = sphi 0, %s97
      %s101 = sphi 0, %s100
      %s117 = sphi 0, %s101
      %s121 = sphi 0, %s121
      %s123 = sphi 0, %s121
      %s124 = sphi 0, %s123
      %s138 = sphi 0, %s124
      %s142 = sphi 0, %s142
      %s144 = sphi 0, %s142
      %s145 = sphi 0, %s144
      %s159 = sphi 0, %s145
      %s163 = sphi 0, %s163
      %s165 = sphi 0, %s163
      %s166 = sphi 0, %s165
      %s180 = sphi 0, %s166
      %s186 = sphi 0, %s188
      %s189 = sphi 0, %s186
      %s190 = sphi 0, %s189
      %s206 = sphi 0, %s190
    $region4: #{local_attention.2} parent=1 // loop_header_branch
      %34 = sbr.rel (%p32) target = $region8
    $region5: #{local_attention.2} parent=1 // loop_body
      %s36 = ssub.s32 %s31, 1
      %s37 = ssub.s32 %s31, 2
      %s38 = sadd.s32 %s31, 1
      %s39 = ssub.s32 %s31, %s38
      %p40 = scmp.eq.s32.totalorder %s39, 0
      %s42 = sadd.s32 %s41, 1
      %s43 = scalar_select %p40, %s41, %s42
      %p46 = pneg %p40
      %p47 = scmp.eq.s32.totalorder %s31, 1
      %p48 = por %p46, %p47
      %p49 = scmp.ne.s32.totalorder %s41, %s44
      %p50 = scmp.eq.s32.totalorder %s31, 0
      %p51 = por %p49, %p50
      %p52 = scmp.ne.s32.totalorder %s41, %s44
      %p53 = scmp.eq.s32.totalorder %s36, 1
      %p54 = por %p52, %p53
      %p55 = scmp.ne.s32.totalorder %s44, %s45
      %p56 = scmp.eq.s32.totalorder %s36, 0
      %p57 = por %p55, %p56
      %p58 = scmp.ne.s32.totalorder %s44, %s45
      %p59 = scmp.eq.s32.totalorder %s37, 1
      %p60 = por %p58, %p59
      %p62 = scmp.ne.s32.totalorder %s45, %s61
      %p63 = scmp.eq.s32.totalorder %s37, 0
      %p64 = por %p62, %p63
      %s67 = ssub.s32 0, 0
      %p68 = scmp.eq.s32.totalorder %s67, 0
      %s70 = sadd.s32 %s69, 1
      %s71 = scalar_select %p68, %s69, %s70
      %p74 = pneg %p68
      %p75 = scmp.eq.s32.totalorder %s31, 1
      %p76 = por %p74, %p75
      %p77 = scmp.ne.s32.totalorder %s69, %s72
      %p78 = scmp.eq.s32.totalorder %s31, 0
      %p79 = por %p77, %p78
      %p80 = scmp.ne.s32.totalorder %s69, %s72
      %p81 = scmp.eq.s32.totalorder %s36, 1
      %p82 = por %p80, %p81
      %p83 = scmp.ne.s32.totalorder %s72, %s73
      %p84 = scmp.eq.s32.totalorder %s36, 0
      %p85 = por %p83, %p84
      %p86 = scmp.ne.s32.totalorder %s72, %s73
      %p87 = scmp.eq.s32.totalorder %s37, 1
      %p88 = por %p86, %p87
      %p90 = scmp.ne.s32.totalorder %s73, %s89
      %p91 = scmp.eq.s32.totalorder %s37, 0
      %p92 = por %p90, %p91
      %s95 = ssub.s32 0, 0
      %p96 = scmp.eq.s32.totalorder %s95, 0
      %s98 = sadd.s32 %s97, 1
      %s99 = scalar_select %p96, %s97, %s98
      %p102 = pneg %p96
      %p103 = scmp.eq.s32.totalorder %s31, 1
      %p104 = por %p102, %p103
      %p105 = scmp.ne.s32.totalorder %s97, %s100
      %p106 = scmp.eq.s32.totalorder %s31, 0
      %p107 = por %p105, %p106
      %p108 = scmp.ne.s32.totalorder %s97, %s100
      %p109 = scmp.eq.s32.totalorder %s36, 1
      %p110 = por %p108, %p109
      %p111 = scmp.ne.s32.totalorder %s100, %s101
      %p112 = scmp.eq.s32.totalorder %s36, 0
      %p113 = por %p111, %p112
      %p114 = scmp.ne.s32.totalorder %s100, %s101
      %p115 = scmp.eq.s32.totalorder %s37, 1
      %p116 = por %p114, %p115
      %p118 = scmp.ne.s32.totalorder %s101, %s117
      %p119 = scmp.eq.s32.totalorder %s37, 0
      %p120 = por %p118, %p119
      %s122 = sadd.s32 %s121, 1
      %p125 = scmp.eq.s32.totalorder %s31, 1
      %p126 = scmp.ne.s32.totalorder %s121, %s123
      %p127 = scmp.eq.s32.totalorder %s31, 0
      %p128 = por %p126, %p127
      %p129 = scmp.ne.s32.totalorder %s121, %s123
      %p130 = scmp.eq.s32.totalorder %s36, 1
      %p131 = por %p129, %p130
      %p132 = scmp.ne.s32.totalorder %s123, %s124
      %p133 = scmp.eq.s32.totalorder %s36, 0
      %p134 = por %p132, %p133
      %p135 = scmp.ne.s32.totalorder %s123, %s124
      %p136 = scmp.eq.s32.totalorder %s37, 1
      %p137 = por %p135, %p136
      %p139 = scmp.ne.s32.totalorder %s124, %s138
      %p140 = scmp.eq.s32.totalorder %s37, 0
      %p141 = por %p139, %p140
      %s143 = sadd.s32 %s142, 1
      %p146 = scmp.eq.s32.totalorder %s31, 1
      %p147 = scmp.ne.s32.totalorder %s142, %s144
      %p148 = scmp.eq.s32.totalorder %s31, 0
      %p149 = por %p147, %p148
      %p150 = scmp.ne.s32.totalorder %s142, %s144
      %p151 = scmp.eq.s32.totalorder %s36, 1
      %p152 = por %p150, %p151
      %p153 = scmp.ne.s32.totalorder %s144, %s145
      %p154 = scmp.eq.s32.totalorder %s36, 0
      %p155 = por %p153, %p154
      %p156 = scmp.ne.s32.totalorder %s144, %s145
      %p157 = scmp.eq.s32.totalorder %s37, 1
      %p158 = por %p156, %p157
      %p160 = scmp.ne.s32.totalorder %s145, %s159
      %p161 = scmp.eq.s32.totalorder %s37, 0
      %p162 = por %p160, %p161
      %s164 = sadd.s32 %s163, 1
      %p167 = scmp.eq.s32.totalorder %s31, 1
      %p168 = scmp.ne.s32.totalorder %s163, %s165
      %p169 = scmp.eq.s32.totalorder %s31, 0
      %p170 = por %p168, %p169
      %p171 = scmp.ne.s32.totalorder %s163, %s165
      %p172 = scmp.eq.s32.totalorder %s36, 1
      %p173 = por %p171, %p172
      %p174 = scmp.ne.s32.totalorder %s165, %s166
      %p175 = scmp.eq.s32.totalorder %s36, 0
      %p176 = por %p174, %p175
      %p177 = scmp.ne.s32.totalorder %s165, %s166
      %p178 = scmp.eq.s32.totalorder %s37, 1
      %p179 = por %p177, %p178
      %p181 = scmp.ne.s32.totalorder %s166, %s180
      %p182 = scmp.eq.s32.totalorder %s37, 0
      %p183 = por %p181, %p182
      %s184 = ssub.s32 %s31, %s38
      %p185 = scmp.eq.s32.totalorder %s184, 0
      %s187 = sadd.s32 %s186, 1
      %s188 = scalar_select %p185, %s186, %s187
      %p191 = pneg %p185
      %p192 = scmp.eq.s32.totalorder %s31, 1
      %p193 = por %p191, %p192
      %p194 = scmp.ne.s32.totalorder %s186, %s189
      %p195 = scmp.eq.s32.totalorder %s31, 0
      %p196 = por %p194, %p195
      %p197 = scmp.ne.s32.totalorder %s186, %s189
      %p198 = scmp.eq.s32.totalorder %s36, 1
      %p199 = por %p197, %p198
      %p200 = scmp.ne.s32.totalorder %s189, %s190
      %p201 = scmp.eq.s32.totalorder %s36, 0
      %p202 = por %p200, %p201
      %p203 = scmp.ne.s32.totalorder %s189, %s190
      %p204 = scmp.eq.s32.totalorder %s37, 1
      %p205 = por %p203, %p204
      %p207 = scmp.ne.s32.totalorder %s190, %s206
      %p208 = scmp.eq.s32.totalorder %s37, 0
      %p209 = por %p207, %p208
      %p210 = scmp.le.s32.totalorder 1, %s31
      %p211 = scmp.lt.s32.totalorder %s31, 3
      %p212 = pnand %p210, %p211
      %p213 = pneg %p212
      // Predicated region
      $region9: #{local_attention.2} parent=5 // pred_check
        _
      $region10: #{local_attention.2} parent=5 // pred_check_branch
        %215 = sbr.rel (%p212) target = $region12
      $region11: #{local_attention.2} parent=5 // pred_region
        %s216 = ssub.s32 %s31, 1
        // Predicated region
        $region13: #{local_attention.2} parent=11 // pred_check
          %p217 = pneg %p85
        $region14: #{local_attention.2} parent=11 // pred_check_branch
          %219 = sbr.rel (%p217) target = $region16
        $region15: #{local_attention.2} parent=11 // pred_region
          %s221 = ssub.s32 1, 0
          %s222 = smul.u32 256, %s221
          %p223 = scmp.lt.s32.totalorder 0, 0
          %s224 = scalar_select %p223, 0, 0
          %s225 = smul.addr %s224, 4
          %s226 = scalar_lea.vmem %s2, %s225
          %s228 = ssub.s32 1, 0
          %s229 = smul.u32 256, %s228
        $region16: #{local_attention.2} parent=11 // pred_fallthru
          _
        // Predicated region
        $region17: #{local_attention.2} parent=11 // pred_check
          %p230 = pneg %p113
        $region18: #{local_attention.2} parent=11 // pred_check_branch
          %232 = sbr.rel (%p230) target = $region20
        $region19: #{local_attention.2} parent=11 // pred_region
          %s234 = ssub.s32 1, 0
          %s235 = smul.u32 256, %s234
          %p236 = scmp.lt.s32.totalorder 0, 0
          %s237 = scalar_select %p236, 0, 0
          %s238 = smul.addr %s237, 4
          %s239 = scalar_lea.vmem %s4, %s238
          %s241 = ssub.s32 1, 0
          %s242 = smul.u32 256, %s241
        $region20: #{local_attention.2} parent=11 // pred_fallthru
          _
        // Predicated region
        $region21: #{local_attention.2} parent=11 // pred_check
          %p243 = pneg %p134
        $region22: #{local_attention.2} parent=11 // pred_check_branch
          %245 = sbr.rel (%p243) target = $region24
        $region23: #{local_attention.2} parent=11 // pred_region
          _
        $region24: #{local_attention.2} parent=11 // pred_fallthru
          _
        // Predicated region
        $region25: #{local_attention.2} parent=11 // pred_check
          %p246 = pneg %p155
        $region26: #{local_attention.2} parent=11 // pred_check_branch
          %248 = sbr.rel (%p246) target = $region28
        $region27: #{local_attention.2} parent=11 // pred_region
          _
        $region28: #{local_attention.2} parent=11 // pred_fallthru
          _
        // Predicated region
        $region29: #{local_attention.2} parent=11 // pred_check
          %p249 = pneg %p176
        $region30: #{local_attention.2} parent=11 // pred_check_branch
          %251 = sbr.rel (%p249) target = $region32
        $region31: #{local_attention.2} parent=11 // pred_region
          _
        $region32: #{local_attention.2} parent=11 // pred_fallthru
          _
      $region12: #{local_attention.2} parent=5 // pred_fallthru
        _
      %p252 = scmp.lt.s32.totalorder %s31, 2
      // Predicated region
      $region33: #{local_attention.2} parent=5 // pred_check
        %p253 = pneg %p252
      $region34: #{local_attention.2} parent=5 // pred_check_branch
        %255 = sbr.rel (%p253) target = $region36
      $region35: #{local_attention.2} parent=5 // pred_region
        // Predicated region
        $region37: #{local_attention.2} parent=35 // pred_check
          %p256 = pneg %p51
        $region38: #{local_attention.2} parent=35 // pred_check_branch
          %258 = sbr.rel (%p256) target = $region40
        $region39: #{local_attention.2} parent=35 // pred_region
          %p259 = scmp.lt.s32.totalorder %s31, 1
          %s260 = scalar_select %p259, %s31, 1
          %s261 = smul.addr %s260, 4
          %s262 = smul.addr %s261, 8
          %s263 = scalar_lea.vmem %s1, %s262
        $region40: #{local_attention.2} parent=35 // pred_fallthru
          _
      $region36: #{local_attention.2} parent=5 // pred_fallthru
        _
      %p264 = scmp.le.s32.totalorder 1, %s31
      %p265 = scmp.lt.s32.totalorder %s31, 3
      %p266 = pnand %p264, %p265
      %p267 = pneg %p266
      // Predicated region
      $region41: #{local_attention.2} parent=5 // pred_check
        _
      $region42: #{local_attention.2} parent=5 // pred_check_branch
        %269 = sbr.rel (%p266) target = $region44
      $region43: #{local_attention.2} parent=5 // pred_region
        #allocation19 [shape = 'u8[8192]{0}', space=vmem, size = 0x2000, dematerialized = true, scoped, tag = 'FusionAdapter Buffer %fusion.1 = bf16[2,32,56]{2,1,0:T(8,128)(2,1)} fusion(%param_1.17), kind=kLoop, calls=%fused_computation.2.clone, metadata={op_name="jit(local_attention)/convert_element_type" stack_frame_id=14}']
        #allocation20 [shape = 'u8[8192]{0}', space=vmem, size = 0x2000, dematerialized = true, scoped, tag = 'FusionAdapter Buffer %fusion.3 = bf16[32,48]{1,0:T(8,128)(2,1)} fusion(%param_2.6, %param_3.7, %param_4.3, %param_5.3), kind=kLoop, calls=%fused_computation.6.clone, metadata={op_name="jit(local_attention)/concatenate" stack_frame_id=11}']
        #allocation21 [shape = 'u8[8192]{0}', space=vmem, size = 0x2000, dematerialized = true, scoped, tag = 'FusionAdapter Buffer %fusion.8 = bf16[32,16]{1,0:T(8,128)(2,1)} fusion(%param_6.4), kind=kLoop, calls=%fused_computation.11.clone, metadata={op_name="jit(local_attention)/convert_element_type" stack_frame_id=12}']
        %s270 = ssub.s32 %s31, 1
        %p271 = scmp.lt.s32.totalorder %s36, 1
        %s272 = scalar_select %p271, %s36, 1
        %s273 = smul.addr %s272, 4
        %s274 = smul.addr %s273, 8
        %s275 = scalar_lea.vmem %s1, %s274
        %p276 = pneg %p57
        %p277 = pneg %p54
        %s279 = ssub.s32 1, 0
        %s280 = smul.u32 256, %s279
        %p281 = scmp.lt.s32.totalorder 0, 0
        %s282 = scalar_select %p281, 0, 0
        %s283 = smul.addr %s282, 4
        %s284 = scalar_lea.vmem %s2, %s283
        %p285 = pneg %p85
        %p286 = pneg %p82
        %s288 = ssub.s32 1, 0
        %s289 = smul.u32 256, %s288
        %p290 = scmp.lt.s32.totalorder 0, 0
        %s291 = scalar_select %p290, 0, 0
        %s292 = smul.addr %s291, 4
        %s293 = scalar_lea.vmem %s4, %s292
        %p294 = pneg %p113
        %p295 = pneg %p110
        %p296 = pneg %p134
        %p297 = pneg %p131
        %p298 = pneg %p155
        %p299 = pneg %p152
        %p300 = pneg %p176
        %p301 = pneg %p173
        %p302 = pneg %p202
        %p303 = pneg %p199
        %s304 = sand.u32 %s189, 1
        %s305 = scalar_lea.sflag [#allocation18], %s304
        %s306 = sand.u32 %s189, 1
        %s307 = smul.addr %s306, 32
        %s308 = scalar_lea.vmem [#allocation17], %s307
        %p309 = scmp.lt.s32.totalorder %s36, 1
        %s310 = scalar_select %p309, %s36, 1
        %s311 = smul.addr %s310, 4
        %s312 = smul.addr %s311, 8
        %s313 = scalar_lea.vmem %s1, %s312
        %s315 = ssub.s32 1, 0
        %s316 = smul.u32 256, %s315
        %p317 = scmp.lt.s32.totalorder 0, 0
        %s318 = scalar_select %p317, 0, 0
        %s319 = smul.addr %s318, 4
        %s320 = scalar_lea.vmem %s2, %s319
        %s322 = ssub.s32 1, 0
        %s323 = smul.u32 256, %s322
        %s325 = ssub.s32 1, 0
        %s326 = smul.u32 256, %s325
        %p327 = scmp.lt.s32.totalorder 0, 0
        %s328 = scalar_select %p327, 0, 0
        %s329 = smul.addr %s328, 4
        %s330 = scalar_lea.vmem %s4, %s329
        %s332 = ssub.s32 1, 0
        %s333 = smul.u32 256, %s332
        %v334 = vld [vmem:[%s313] sm:$0xff]
        %335 = xla_tuple %v334
        %336 = xla_tuple %335
        %337 = xla_tuple %v334
        %v338 = vpack.c.bf16 0.0, %v334
        %s340 = ssub.s32 16, 1
        %341 = vst [vmem:[#allocation19] sm:%s340] %v338
        %s342 = scalar_lea.vmem %s313, 8
        %v343 = vld [vmem:[%s342] sm:$0xff]
        %344 = xla_tuple %v343
        %345 = xla_tuple %344
        %346 = xla_tuple %v343
        %s347 = scalar_lea.vmem [#allocation19], 4
        %v348 = vpack.c.bf16 0.0, %v343
        %s350 = ssub.s32 16, 1
        %351 = vst [vmem:[%s347] sm:%s350] %v348
        %s352 = scalar_lea.vmem %s313, 16
        %v353 = vld [vmem:[%s352] sm:$0xff]
        %354 = xla_tuple %v353
        %355 = xla_tuple %354
        %356 = xla_tuple %v353
        %s357 = scalar_lea.vmem [#allocation19], 8
        %v358 = vpack.c.bf16 0.0, %v353
        %s360 = ssub.s32 16, 1
        %361 = vst [vmem:[%s357] sm:%s360] %v358
        %s362 = scalar_lea.vmem %s313, 24
        %v363 = vld [vmem:[%s362] sm:$0xff]
        %364 = xla_tuple %v363
        %365 = xla_tuple %364
        %366 = xla_tuple %v363
        %s367 = scalar_lea.vmem [#allocation19], 12
        %v368 = vpack.c.bf16 0.0, %v363
        %s370 = ssub.s32 16, 1
        %371 = vst [vmem:[%s367] sm:%s370] %v368
        %s372 = ssub.s32 0, 0
        %p373 = scmp.lt.s32.totalorder %s372, 0
        %s374 = scalar_select %p373, 0, 255
        %s375 = sshrl.u32 %s374, 1
        %s376 = sor.u32 %s374, %s375
        %s377 = sand.u32 %s376, 85
        %s378 = sshrl.u32 %s377, 1
        %s379 = sor.u32 %s377, %s378
        %s380 = sand.u32 51, %s379
        %s381 = sshrl.u32 %s380, 2
        %s382 = sor.u32 %s380, %s381
        %s383 = sand.u32 15, %s382
        %v384 = vld [vmem:[%s320] sm:%s383]
        %v385 = vunpack.c.l.bf16 %v384
        %v386 = vunpack.c.h.bf16 %v384
        %v387 = vlaneseq
        %v388 = vand.u32 %v387, 127
        %v389 = vadd.s32 %v388, 128
        %vm390 = vcmp.lt.s32.totalorder %v389, 144
        %v391 = vsel %vm390, %v385, %v13
        %v392 = vlaneseq
        %v393 = vand.u32 %v392, 127
        %vm394 = vcmp.lt.s32.totalorder %v393, 96
        %v395 = vsel %vm394, %v391, %v13
        %396 = vrot.lane.b32.xlu0 %v395, 32
        %v397 = vpop.permute.xlu0 %396
        %s398 = ssub.s32 0, 0
        %p399 = scmp.lt.s32.totalorder %s398, 0
        %s400 = scalar_select %p399, 0, 255
        %s401 = sshrl.u32 %s400, 1
        %s402 = sor.u32 %s400, %s401
        %s403 = sand.u32 %s402, 85
        %s404 = sshrl.u32 %s403, 1
        %s405 = sor.u32 %s403, %s404
        %s406 = sand.u32 51, %s405
        %s407 = sshrl.u32 %s406, 2
        %s408 = sor.u32 %s406, %s407
        %s409 = sand.u32 15, %s408
        %v410 = vld [vmem:[%s330] sm:%s409]
        %v411 = vunpack.c.l.bf16 %v410
        %v412 = vunpack.c.h.bf16 %v410
        %v413 = vlaneseq
        %v414 = vand.u32 %v413, 127
        %v415 = vadd.s32 %v414, 128
        %vm416 = vcmp.lt.s32.totalorder %v415, 144
        %v417 = vsel %vm416, %v411, %v18
        %v418 = vlaneseq
        %v419 = vand.u32 %v418, 127
        %vm420 = vcmp.lt.s32.totalorder %v419, 112
        %v421 = vsel %vm420, %v417, %v18
        %422 = vrot.lane.b32.xlu0 %v421, 16
        %v423 = vpop.permute.xlu0 %422
        %s425 = sor.u32 255, 127
        %s426 = sand.u32 %s425, 85
        %s427 = sshrl.u32 %s426, 1
        %s428 = sor.u32 %s426, %s427
        %s429 = sand.u32 51, %s428
        %s430 = sshrl.u32 %s429, 2
        %s431 = sor.u32 %s429, %s430
        %s432 = sand.u32 15, %s431
        %v433 = vld [vmem:[%s5] sm:%s432]
        %v434 = vunpack.c.l.bf16 %v433
        %v435 = vunpack.c.h.bf16 %v433
        %v436 = vlaneseq
        %v437 = vand.u32 %v436, 127
        %vm439 = vcmp.lt.s32.totalorder %v437, 16
        %v440 = vsel %vm439, %v434, %v23
        %441 = xla_tuple %v440, %v423
        %442 = xla_tuple %441
        %v443 = vmax.f32 %v440, %v423
        %444 = xla_tuple %v443
        %445 = xla_tuple %v443, %v397
        %446 = xla_tuple %445
        %v447 = vmax.f32 %v443, %v397
        %448 = xla_tuple %v447
        %v449 = vpack.c.bf16 0.0, %v447
        %s451 = ssub.s32 16, 1
        %452 = vst [vmem:[#allocation20] sm:%s451] %v449
        %s453 = scalar_lea.vmem %s320, 4
        %s454 = ssub.s32 0, 0
        %p455 = scmp.lt.s32.totalorder %s454, 0
        %s456 = scalar_select %p455, 0, 255
        %s457 = sshrl.u32 %s456, 1
        %s458 = sor.u32 %s456, %s457
        %s459 = sand.u32 %s458, 85
        %s460 = sshrl.u32 %s459, 1
        %s461 = sor.u32 %s459, %s460
        %s462 = sand.u32 51, %s461
        %s463 = sshrl.u32 %s462, 2
        %s464 = sor.u32 %s462, %s463
        %s465 = sand.u32 15, %s464
        %v466 = vld [vmem:[%s453] sm:%s465]
        %v467 = vunpack.c.l.bf16 %v466
        %v468 = vunpack.c.h.bf16 %v466
        %s469 = scalar_lea.vmem %s320, 4
        %v470 = vlaneseq
        %v471 = vand.u32 %v470, 127
        %v472 = vadd.s32 %v471, 128
        %vm473 = vcmp.lt.s32.totalorder %v472, 144
        %v474 = vsel %vm473, %v467, %v13
        %v475 = vlaneseq
        %v476 = vand.u32 %v475, 127
        %vm477 = vcmp.lt.s32.totalorder %v476, 96
        %v478 = vsel %vm477, %v474, %v13
        %479 = vrot.lane.b32.xlu0 %v478, 32
        %v480 = vpop.permute.xlu0 %479
        %s481 = scalar_lea.vmem %s330, 4
        %s482 = ssub.s32 0, 0
        %p483 = scmp.lt.s32.totalorder %s482, 0
        %s484 = scalar_select %p483, 0, 255
        %s485 = sshrl.u32 %s484, 1
        %s486 = sor.u32 %s484, %s485
        %s487 = sand.u32 %s486, 85
        %s488 = sshrl.u32 %s487, 1
        %s489 = sor.u32 %s487, %s488
        %s490 = sand.u32 51, %s489
        %s491 = sshrl.u32 %s490, 2
        %s492 = sor.u32 %s490, %s491
        %s493 = sand.u32 15, %s492
        %v494 = vld [vmem:[%s481] sm:%s493]
        %v495 = vunpack.c.l.bf16 %v494
        %v496 = vunpack.c.h.bf16 %v494
        %s497 = scalar_lea.vmem %s330, 4
        %v498 = vlaneseq
        %v499 = vand.u32 %v498, 127
        %v500 = vadd.s32 %v499, 128
        %vm501 = vcmp.lt.s32.totalorder %v500, 144
        %v502 = vsel %vm501, %v495, %v18
        %v503 = vlaneseq
        %v504 = vand.u32 %v503, 127
        %vm505 = vcmp.lt.s32.totalorder %v504, 112
        %v506 = vsel %vm505, %v502, %v18
        %507 = vrot.lane.b32.xlu0 %v506, 16
        %v508 = vpop.permute.xlu0 %507
        %s509 = scalar_lea.vmem %s5, 4
        %s511 = sor.u32 255, 127
        %s512 = sand.u32 %s511, 85
        %s513 = sshrl.u32 %s512, 1
        %s514 = sor.u32 %s512, %s513
        %s515 = sand.u32 51, %s514
        %s516 = sshrl.u32 %s515, 2
        %s517 = sor.u32 %s515, %s516
        %s518 = sand.u32 15, %s517
        %v519 = vld [vmem:[%s509] sm:%s518]
        %v520 = vunpack.c.l.bf16 %v519
        %v521 = vunpack.c.h.bf16 %v519
        %v522 = vlaneseq
        %v523 = vand.u32 %v522, 127
        %vm525 = vcmp.lt.s32.totalorder %v523, 16
        %v526 = vsel %vm525, %v520, %v23
        %527 = xla_tuple %v526, %v508
        %528 = xla_tuple %527
        %v529 = vmax.f32 %v526, %v508
        %530 = xla_tuple %v529
        %531 = xla_tuple %v529, %v480
        %532 = xla_tuple %531
        %v533 = vmax.f32 %v529, %v480
        %534 = xla_tuple %v533
        %s535 = scalar_lea.vmem [#allocation20], 4
        %v536 = vpack.c.bf16 0.0, %v533
        %s538 = ssub.s32 16, 1
        %539 = vst [vmem:[%s535] sm:%s538] %v536
        %s540 = scalar_lea.vmem %s320, 8
        %s541 = ssub.s32 0, 0
        %p542 = scmp.lt.s32.totalorder %s541, 0
        %s543 = scalar_select %p542, 0, 255
        %s544 = sshrl.u32 %s543, 1
        %s545 = sor.u32 %s543, %s544
        %s546 = sand.u32 %s545, 85
        %s547 = sshrl.u32 %s546, 1
        %s548 = sor.u32 %s546, %s547
        %s549 = sand.u32 51, %s548
        %s550 = sshrl.u32 %s549, 2
        %s551 = sor.u32 %s549, %s550
        %s552 = sand.u32 15, %s551
        %v553 = vld [vmem:[%s540] sm:%s552]
        %v554 = vunpack.c.l.bf16 %v553
        %v555 = vunpack.c.h.bf16 %v553
        %s556 = scalar_lea.vmem %s320, 8
        %v557 = vlaneseq
        %v558 = vand.u32 %v557, 127
        %v559 = vadd.s32 %v558, 128
        %vm560 = vcmp.lt.s32.totalorder %v559, 144
        %v561 = vsel %vm560, %v554, %v13
        %v562 = vlaneseq
        %v563 = vand.u32 %v562, 127
        %vm564 = vcmp.lt.s32.totalorder %v563, 96
        %v565 = vsel %vm564, %v561, %v13
        %566 = vrot.lane.b32.xlu0 %v565, 32
        %v567 = vpop.permute.xlu0 %566
        %s568 = scalar_lea.vmem %s330, 8
        %s569 = ssub.s32 0, 0
        %p570 = scmp.lt.s32.totalorder %s569, 0
        %s571 = scalar_select %p570, 0, 255
        %s572 = sshrl.u32 %s571, 1
        %s573 = sor.u32 %s571, %s572
        %s574 = sand.u32 %s573, 85
        %s575 = sshrl.u32 %s574, 1
        %s576 = sor.u32 %s574, %s575
        %s577 = sand.u32 51, %s576
        %s578 = sshrl.u32 %s577, 2
        %s579 = sor.u32 %s577, %s578
        %s580 = sand.u32 15, %s579
        %v581 = vld [vmem:[%s568] sm:%s580]
        %v582 = vunpack.c.l.bf16 %v581
        %v583 = vunpack.c.h.bf16 %v581
        %s584 = scalar_lea.vmem %s330, 8
        %v585 = vlaneseq
        %v586 = vand.u32 %v585, 127
        %v587 = vadd.s32 %v586, 128
        %vm588 = vcmp.lt.s32.totalorder %v587, 144
        %v589 = vsel %vm588, %v582, %v18
        %v590 = vlaneseq
        %v591 = vand.u32 %v590, 127
        %vm592 = vcmp.lt.s32.totalorder %v591, 112
        %v593 = vsel %vm592, %v589, %v18
        %594 = vrot.lane.b32.xlu0 %v593, 16
        %v595 = vpop.permute.xlu0 %594
        %s596 = scalar_lea.vmem %s5, 8
        %s598 = sor.u32 255, 127
        %s599 = sand.u32 %s598, 85
        %s600 = sshrl.u32 %s599, 1
        %s601 = sor.u32 %s599, %s600
        %s602 = sand.u32 51, %s601
        %s603 = sshrl.u32 %s602, 2
        %s604 = sor.u32 %s602, %s603
        %s605 = sand.u32 15, %s604
        %v606 = vld [vmem:[%s596] sm:%s605]
        %v607 = vunpack.c.l.bf16 %v606
        %v608 = vunpack.c.h.bf16 %v606
        %v609 = vlaneseq
        %v610 = vand.u32 %v609, 127
        %vm612 = vcmp.lt.s32.totalorder %v610, 16
        %v613 = vsel %vm612, %v607, %v23
        %614 = xla_tuple %v613, %v595
        %615 = xla_tuple %614
        %v616 = vmax.f32 %v613, %v595
        %617 = xla_tuple %v616
        %618 = xla_tuple %v616, %v567
        %619 = xla_tuple %618
        %v620 = vmax.f32 %v616, %v567
        %621 = xla_tuple %v620
        %s622 = scalar_lea.vmem [#allocation20], 8
        %v623 = vpack.c.bf16 0.0, %v620
        %s625 = ssub.s32 16, 1
        %626 = vst [vmem:[%s622] sm:%s625] %v623
        %s627 = scalar_lea.vmem %s320, 12
        %s628 = ssub.s32 0, 0
        %p629 = scmp.lt.s32.totalorder %s628, 0
        %s630 = scalar_select %p629, 0, 255
        %s631 = sshrl.u32 %s630, 1
        %s632 = sor.u32 %s630, %s631
        %s633 = sand.u32 %s632, 85
        %s634 = sshrl.u32 %s633, 1
        %s635 = sor.u32 %s633, %s634
        %s636 = sand.u32 51, %s635
        %s637 = sshrl.u32 %s636, 2
        %s638 = sor.u32 %s636, %s637
        %s639 = sand.u32 15, %s638
        %v640 = vld [vmem:[%s627] sm:%s639]
        %v641 = vunpack.c.l.bf16 %v640
        %v642 = vunpack.c.h.bf16 %v640
        %s643 = scalar_lea.vmem %s320, 12
        %v644 = vlaneseq
        %v645 = vand.u32 %v644, 127
        %v646 = vadd.s32 %v645, 128
        %vm647 = vcmp.lt.s32.totalorder %v646, 144
        %v648 = vsel %vm647, %v641, %v13
        %v649 = vlaneseq
        %v650 = vand.u32 %v649, 127
        %vm651 = vcmp.lt.s32.totalorder %v650, 96
        %v652 = vsel %vm651, %v648, %v13
        %653 = vrot.lane.b32.xlu0 %v652, 32
        %v654 = vpop.permute.xlu0 %653
        %s655 = scalar_lea.vmem %s330, 12
        %s656 = ssub.s32 0, 0
        %p657 = scmp.lt.s32.totalorder %s656, 0
        %s658 = scalar_select %p657, 0, 255
        %s659 = sshrl.u32 %s658, 1
        %s660 = sor.u32 %s658, %s659
        %s661 = sand.u32 %s660, 85
        %s662 = sshrl.u32 %s661, 1
        %s663 = sor.u32 %s661, %s662
        %s664 = sand.u32 51, %s663
        %s665 = sshrl.u32 %s664, 2
        %s666 = sor.u32 %s664, %s665
        %s667 = sand.u32 15, %s666
        %v668 = vld [vmem:[%s655] sm:%s667]
        %v669 = vunpack.c.l.bf16 %v668
        %v670 = vunpack.c.h.bf16 %v668
        %s671 = scalar_lea.vmem %s330, 12
        %v672 = vlaneseq
        %v673 = vand.u32 %v672, 127
        %v674 = vadd.s32 %v673, 128
        %vm675 = vcmp.lt.s32.totalorder %v674, 144
        %v676 = vsel %vm675, %v669, %v18
        %v677 = vlaneseq
        %v678 = vand.u32 %v677, 127
        %vm679 = vcmp.lt.s32.totalorder %v678, 112
        %v680 = vsel %vm679, %v676, %v18
        %681 = vrot.lane.b32.xlu0 %v680, 16
        %v682 = vpop.permute.xlu0 %681
        %s683 = scalar_lea.vmem %s5, 12
        %s685 = sor.u32 255, 127
        %s686 = sand.u32 %s685, 85
        %s687 = sshrl.u32 %s686, 1
        %s688 = sor.u32 %s686, %s687
        %s689 = sand.u32 51, %s688
        %s690 = sshrl.u32 %s689, 2
        %s691 = sor.u32 %s689, %s690
        %s692 = sand.u32 15, %s691
        %v693 = vld [vmem:[%s683] sm:%s692]
        %v694 = vunpack.c.l.bf16 %v693
        %v695 = vunpack.c.h.bf16 %v693
        %v696 = vlaneseq
        %v697 = vand.u32 %v696, 127
        %vm699 = vcmp.lt.s32.totalorder %v697, 16
        %v700 = vsel %vm699, %v694, %v23
        %701 = xla_tuple %v700, %v682
        %702 = xla_tuple %701
        %v703 = vmax.f32 %v700, %v682
        %704 = xla_tuple %v703
        %705 = xla_tuple %v703, %v654
        %706 = xla_tuple %705
        %v707 = vmax.f32 %v703, %v654
        %708 = xla_tuple %v707
        %s709 = scalar_lea.vmem [#allocation20], 12
        %v710 = vpack.c.bf16 0.0, %v707
        %s712 = ssub.s32 16, 1
        %713 = vst [vmem:[%s709] sm:%s712] %v710
        %v714 = vld [vmem:[%s6] sm:$0xf]
        %v715 = vunpack.c.l.bf16 %v714
        %v716 = vunpack.c.h.bf16 %v714
        %v717 = vpack.c.bf16 0.0, %v715
        %s719 = ssub.s32 16, 1
        %720 = vst [vmem:[#allocation21] sm:%s719] %v717
        %s721 = scalar_lea.vmem %s6, 4
        %v722 = vld [vmem:[%s721] sm:$0xf]
        %v723 = vunpack.c.l.bf16 %v722
        %v724 = vunpack.c.h.bf16 %v722
        %s725 = scalar_lea.vmem [#allocation21], 4
        %v726 = vpack.c.bf16 0.0, %v723
        %s728 = ssub.s32 16, 1
        %729 = vst [vmem:[%s725] sm:%s728] %v726
        %s730 = scalar_lea.vmem %s6, 8
        %v731 = vld [vmem:[%s730] sm:$0xf]
        %v732 = vunpack.c.l.bf16 %v731
        %v733 = vunpack.c.h.bf16 %v731
        %s734 = scalar_lea.vmem [#allocation21], 8
        %v735 = vpack.c.bf16 0.0, %v732
        %s737 = ssub.s32 16, 1
        %738 = vst [vmem:[%s734] sm:%s737] %v735
        %s739 = scalar_lea.vmem %s6, 12
        %v740 = vld [vmem:[%s739] sm:$0xf]
        %v741 = vunpack.c.l.bf16 %v740
        %v742 = vunpack.c.h.bf16 %v740
        %s743 = scalar_lea.vmem [#allocation21], 12
        %v744 = vpack.c.bf16 0.0, %v741
        %s746 = ssub.s32 16, 1
        %747 = vst [vmem:[%s743] sm:%s746] %v744
        %v749 = vld [vmem:[#allocation20] sm:$0xf]
        %v750 = vld [vmem:[#allocation20 + $0x4] sm:$0xf]
        %v751 = vld [vmem:[#allocation20 + $0x8] sm:$0xf]
        %v752 = vld [vmem:[#allocation20 + $0xc] sm:$0xf]
        %v753 = vld [vmem:[#allocation21] sm:$0xf]
        %v754 = vld [vmem:[#allocation21 + $0x4] sm:$0xf]
        %v755 = vld [vmem:[#allocation21 + $0x8] sm:$0xf]
        %v756 = vld [vmem:[#allocation21 + $0xc] sm:$0xf]
        %v757 = vld [vmem:[%s0] sm:$0xff]
        %v758 = vld [vmem:[%s0 + $0x8] sm:$0xff]
        %v759 = vld [vmem:[%s0 + $0x10] sm:$0xff]
        %v760 = vld [vmem:[%s0 + $0x18] sm:$0xff]
        %v761 = vld [vmem:[#allocation19] sm:$0xf]
        %v762 = vld [vmem:[#allocation19 + $0x4] sm:$0xf]
        %v763 = vld [vmem:[#allocation19 + $0x8] sm:$0xf]
        %v764 = vld [vmem:[#allocation19 + $0xc] sm:$0xf]
        %v769 = vunpack.c.l.b16 %v761
        %v770 = vunpack.c.l.b16 %v762
        %v771 = vunpack.c.l.b16 %v763
        %v772 = vunpack.c.l.b16 %v764
        %v773 = vpack.c.b16 %v770, %v769
        %v774 = vpack.c.b16 %v772, %v771
        %777 = vxpose.xlu0.c.b16.start [1/8] %v773, 128
        %778 = vxpose.xlu0.c.b16.cont [2/8] %v774, 128
        %779 = vxpose.xlu0.c.b16.cont [3/8] 0, 128
        %780 = vxpose.xlu0.c.b16.cont [4/8] 0, 128
        %781 = vxpose.xlu0.c.b16.cont [5/8] 0, 128
        %782 = vxpose.xlu0.c.b16.cont [6/8] 0, 128
        %783 = vxpose.xlu0.c.b16.cont [7/8] 0, 128
        %784 = vxpose.xlu0.c.b16.end [8/8] 0, 128
        %v785 = vpop.trf.xlu0
        %v786 = vpop.trf.xlu0
        %v787 = vpop.trf.xlu0
        %v788 = vpop.trf.xlu0
        %v789 = vpop.trf.xlu0
        %v790 = vpop.trf.xlu0
        %v791 = vpop.trf.xlu0
        %v792 = vpop.trf.xlu0
        %v797 = vunpack.c.l.b16 %v749
        %v798 = vunpack.c.l.b16 %v750
        %v799 = vunpack.c.l.b16 %v751
        %v800 = vunpack.c.l.b16 %v752
        %v801 = vpack.c.b16 %v798, %v797
        %v802 = vpack.c.b16 %v800, %v799
        %vm805 = vcmask 261120
        %v807 = vsel %vm805, %v785, 0
        %v810 = vsel %vm805, %v786, 0
        %v813 = vsel %vm805, %v787, 0
        %v816 = vsel %vm805, %v788, 0
        %818 = vmatprep.subr.bf16.mxu0 0
        %819 = vmatpush1.bf16.msra.mxu0 0
        %820 = vmatprep.subr.bf16.mxu0 0
        %821 = vmatpush1.bf16.msra.mxu0 0
        %822 = vmatprep.subr.bf16.mxu0 0
        %823 = vmatpush1.bf16.msra.mxu0 0
        %824 = vmatprep.subr.bf16.mxu0 0
        %825 = vmatpush1.bf16.msra.mxu0 0
        %826 = vmatprep.subr.bf16.mxu0 0
        %827 = vmatpush1.bf16.msra.mxu0 0
        %828 = vmatprep.subr.bf16.mxu0 0
        %829 = vmatpush1.bf16.msra.mxu0 0
        %830 = vmatprep.subr.bf16.mxu0 0
        %831 = vmatpush1.bf16.msra.mxu0 %v802
        %832 = vmatprep.subr.bf16.mxu0 0
        %833 = vmatpush1.bf16.msra.mxu0 %v801
        %834 = vmatprep.subr.bf16.mxu0 0
        %835 = vmatpush2.bf16.msra.mxu0 0
        %836 = vmatprep.subr.bf16.mxu0 0
        %837 = vmatpush2.bf16.msra.mxu0 0
        %838 = vmatprep.subr.bf16.mxu0 0
        %839 = vmatpush2.bf16.msra.mxu0 0
        %840 = vmatprep.subr.bf16.mxu0 0
        %841 = vmatpush2.bf16.msra.mxu0 0
        %842 = vmatprep.subr.bf16.mxu0 0
        %843 = vmatpush2.bf16.msra.mxu0 0
        %844 = vmatprep.subr.bf16.mxu0 0
        %845 = vmatpush2.bf16.msra.mxu0 0
        %846 = vmatprep.subr.bf16.mxu0 0
        %847 = vmatpush2.bf16.msra.mxu0 0
        %848 = vmatprep.subr.bf16.mxu0 0
        %849 = vmatpush2.bf16.msra.mxu0 0
        %850 = vmatprep.mubr.bf16.mxu0 0
        %851 = vmatmul.mubr.bf16.gmra.mxu0 %v807
        %v852 = vpop.f32.mrf.mxu0
        %v853 = vadd.f32 0.0, %v852
        %v854 = vpop.f32.mrf.mxu0
        %v855 = vpop.f32.mrf.mxu0
        %v856 = vadd.f32 0.0, %v855
        %v857 = vpop.f32.mrf.mxu0
        %858 = vmatprep.mubr.bf16.mxu0 0
        %859 = vmatmul.mubr.bf16.gmra.mxu0 %v810
        %v860 = vpop.f32.mrf.mxu0
        %v861 = vadd.f32 0.0, %v860
        %v862 = vpop.f32.mrf.mxu0
        %v863 = vpop.f32.mrf.mxu0
        %v864 = vadd.f32 0.0, %v863
        %v865 = vpop.f32.mrf.mxu0
        %866 = vmatprep.mubr.bf16.mxu0 0
        %867 = vmatmul.mubr.bf16.gmra.mxu0 %v813
        %v868 = vpop.f32.mrf.mxu0
        %v869 = vadd.f32 0.0, %v868
        %v870 = vpop.f32.mrf.mxu0
        %v871 = vpop.f32.mrf.mxu0
        %v872 = vadd.f32 0.0, %v871
        %v873 = vpop.f32.mrf.mxu0
        %874 = vmatprep.mubr.bf16.mxu0 0
        %875 = vmatmul.mubr.bf16.gmra.mxu0 %v816
        %v876 = vpop.f32.mrf.mxu0
        %v877 = vadd.f32 0.0, %v876
        %v878 = vpop.f32.mrf.mxu0
        %v879 = vpop.f32.mrf.mxu0
        %v880 = vpop.f32.mrf.mxu0
        %881 = vdwg.mxu0
        %v882 = vpack.c.bf16 %v856, %v853
        %v883 = vpack.c.bf16 %v864, %v861
        %v884 = vpack.c.bf16 %v872, %v869
        %v885 = vpack.c.bf16 %v877, %v877
        %v887 = vshrl.u32 %v882, 16
        %v889 = vrot.slane %v887, 3
        %v890 = vshll.u32 %v882, 16
        %v892 = vrot.slane %v890, 4
        %v893 = vor.u32 %v889, %v892
        %vm896 = vcmask 1040384
        %v897 = vrot.slane %v882, 7
        %v898 = vrot.slane %v883, 7
        %v899 = vsel %vm896, %v897, %v898
        %v901 = vshrl.u32 %v883, 16
        %v903 = vrot.slane %v901, 2
        %v904 = vshll.u32 %v883, 16
        %v906 = vrot.slane %v904, 3
        %v907 = vor.u32 %v903, %v906
        %vm909 = vcmask 1041408
        %v910 = vrot.slane %v883, 6
        %v911 = vrot.slane %v884, 6
        %v912 = vsel %vm909, %v910, %v911
        %v914 = vshrl.u32 %v884, 16
        %v916 = vrot.slane %v914, 1
        %v917 = vshll.u32 %v884, 16
        %v919 = vrot.slane %v917, 2
        %v920 = vor.u32 %v916, %v919
        %vm922 = vcmask 1042432
        %v923 = vrot.slane %v884, 5
        %v924 = vrot.slane %v885, 5
        %v925 = vsel %vm922, %v923, %v924
        %v927 = vshrl.u32 %v885, 16
        %v929 = vshll.u32 %v885, 16
        %v931 = vrot.slane %v929, 1
        %v932 = vor.u32 %v927, %v931
        %933 = vrot.lane.b32.xlu0 %v882, 112
        %v934 = vpop.permute.xlu0 %933
        %vm935 = vcmask 64512
        %v936 = vsel %vm935, %v882, 0
        %v939 = vsel %vm935, %v934, 0
        %941 = vmatprep.subr.bf16.mxu0 0
        %942 = vmatpush1.bf16.xpose.msra.mxu0 0
        %943 = vmatprep.subr.bf16.mxu0 0
        %944 = vmatpush1.bf16.xpose.msra.mxu0 0
        %945 = vmatprep.subr.bf16.mxu0 0
        %946 = vmatpush1.bf16.xpose.msra.mxu0 0
        %947 = vmatprep.subr.bf16.mxu0 0
        %948 = vmatpush1.bf16.xpose.msra.mxu0 0
        %949 = vmatprep.subr.bf16.mxu0 0
        %950 = vmatpush1.bf16.xpose.msra.mxu0 0
        %951 = vmatprep.subr.bf16.mxu0 0
        %952 = vmatpush1.bf16.xpose.msra.mxu0 0
        %953 = vmatprep.subr.bf16.mxu0 0
        %954 = vmatpush1.bf16.xpose.msra.mxu0 0
        %955 = vmatprep.subr.bf16.mxu0 0
        %956 = vmatpush1.bf16.xpose.msra.mxu0 %v939
        %957 = vmatprep.subr.bf16.mxu0 0
        %958 = vmatpush2.bf16.xpose.msra.mxu0 0
        %959 = vmatprep.subr.bf16.mxu0 0
        %960 = vmatpush2.bf16.xpose.msra.mxu0 0
        %961 = vmatprep.subr.bf16.mxu0 0
        %962 = vmatpush2.bf16.xpose.msra.mxu0 0
        %963 = vmatprep.subr.bf16.mxu0 0
        %964 = vmatpush2.bf16.xpose.msra.mxu0 0
        %965 = vmatprep.subr.bf16.mxu0 0
        %966 = vmatpush2.bf16.xpose.msra.mxu0 0
        %967 = vmatprep.subr.bf16.mxu0 0
        %968 = vmatpush2.bf16.xpose.msra.mxu0 0
        %969 = vmatprep.subr.bf16.mxu0 0
        %970 = vmatpush2.bf16.xpose.msra.mxu0 0
        %971 = vmatprep.subr.bf16.mxu0 0
        %972 = vmatpush2.bf16.xpose.msra.mxu0 0
        %973 = vmatprep.mubr.bf16.mxu0 0
        %974 = vmatmul.mubr.bf16.gmra.mxu0 %v936
        %v975 = vpop.f32.mrf.mxu0
        %v976 = vadd.f32 0.0, %v975
        %v977 = vpop.f32.mrf.mxu0
        %v978 = vpop.f32.mrf.mxu0
        %v979 = vpop.f32.mrf.mxu0
        %980 = vdwg.mxu0
        %981 = vrot.lane.b32.xlu0 %v893, 112
        %v982 = vpop.permute.xlu0 %981
        %v984 = vsel %vm935, %v893, 0
        %v987 = vsel %vm935, %v982, 0
        %989 = vmatprep.subr.bf16.mxu0 0
        %990 = vmatpush1.bf16.xpose.msra.mxu0 0
        %991 = vmatprep.subr.bf16.mxu0 0
        %992 = vmatpush1.bf16.xpose.msra.mxu0 0
        %993 = vmatprep.subr.bf16.mxu0 0
        %994 = vmatpush1.bf16.xpose.msra.mxu0 0
        %995 = vmatprep.subr.bf16.mxu0 0
        %996 = vmatpush1.bf16.xpose.msra.mxu0 0
        %997 = vmatprep.subr.bf16.mxu0 0
        %998 = vmatpush1.bf16.xpose.msra.mxu0 0
        %999 = vmatprep.subr.bf16.mxu0 0
        %1000 = vmatpush1.bf16.xpose.msra.mxu0 0
        %1001 = vmatprep.subr.bf16.mxu0 0
        %1002 = vmatpush1.bf16.xpose.msra.mxu0 0
        %1003 = vmatprep.subr.bf16.mxu0 0
        %1004 = vmatpush1.bf16.xpose.msra.mxu0 %v987
        %1005 = vmatprep.subr.bf16.mxu0 0
        %1006 = vmatpush2.bf16.xpose.msra.mxu0 0
        %1007 = vmatprep.subr.bf16.mxu0 0
        %1008 = vmatpush2.bf16.xpose.msra.mxu0 0
        %1009 = vmatprep.subr.bf16.mxu0 0
        %1010 = vmatpush2.bf16.xpose.msra.mxu0 0
        %1011 = vmatprep.subr.bf16.mxu0 0
        %1012 = vmatpush2.bf16.xpose.msra.mxu0 0
        %1013 = vmatprep.subr.bf16.mxu0 0
        %1014 = vmatpush2.bf16.xpose.msra.mxu0 0
        %1015 = vmatprep.subr.bf16.mxu0 0
        %1016 = vmatpush2.bf16.xpose.msra.mxu0 0
        %1017 = vmatprep.subr.bf16.mxu0 0
        %1018 = vmatpush2.bf16.xpose.msra.mxu0 0
        %1019 = vmatprep.subr.bf16.mxu0 0
        %1020 = vmatpush2.bf16.xpose.msra.mxu0 0
        %1021 = vmatprep.mubr.bf16.mxu0 0
        %1022 = vmatmul.mubr.bf16.gmra.mxu0 %v984
        %v1023 = vpop.f32.mrf.mxu0
        %v1024 = vadd.f32 0.0, %v1023
        %v1025 = vpop.f32.mrf.mxu0
        %v1026 = vpop.f32.mrf.mxu0
        %v1027 = vpop.f32.mrf.mxu0
        %1028 = vdwg.mxu0
        %1029 = vrot.lane.b32.xlu0 %v899, 112
        %v1030 = vpop.permute.xlu0 %1029
        %v1032 = vsel %vm935, %v899, 0
        %v1035 = vsel %vm935, %v1030, 0
        %1037 = vmatprep.subr.bf16.mxu0 0
        %1038 = vmatpush1.bf16.xpose.msra.mxu0 0
        %1039 = vmatprep.subr.bf16.mxu0 0
        %1040 = vmatpush1.bf16.xpose.msra.mxu0 0
        %1041 = vmatprep.subr.bf16.mxu0 0
        %1042 = vmatpush1.bf16.xpose.msra.mxu0 0
        %1043 = vmatprep.subr.bf16.mxu0 0
        %1044 = vmatpush1.bf16.xpose.msra.mxu0 0
        %1045 = vmatprep.subr.bf16.mxu0 0
        %1046 = vmatpush1.bf16.xpose.msra.mxu0 0
        %1047 = vmatprep.subr.bf16.mxu0 0
        %1048 = vmatpush1.bf16.xpose.msra.mxu0 0
        %1049 = vmatprep.subr.bf16.mxu0 0
        %1050 = vmatpush1.bf16.xpose.msra.mxu0 0
        %1051 = vmatprep.subr.bf16.mxu0 0
        %1052 = vmatpush1.bf16.xpose.msra.mxu0 %v1035
        %1053 = vmatprep.subr.bf16.mxu0 0
        %1054 = vmatpush2.bf16.xpose.msra.mxu0 0
        %1055 = vmatprep.subr.bf16.mxu0 0
        %1056 = vmatpush2.bf16.xpose.msra.mxu0 0
        %1057 = vmatprep.subr.bf16.mxu0 0
        %1058 = vmatpush2.bf16.xpose.msra.mxu0 0
        %1059 = vmatprep.subr.bf16.mxu0 0
        %1060 = vmatpush2.bf16.xpose.msra.mxu0 0
        %1061 = vmatprep.subr.bf16.mxu0 0
        %1062 = vmatpush2.bf16.xpose.msra.mxu0 0
        %1063 = vmatprep.subr.bf16.mxu0 0
        %1064 = vmatpush2.bf16.xpose.msra.mxu0 0
        %1065 = vmatprep.subr.bf16.mxu0 0
        %1066 = vmatpush2.bf16.xpose.msra.mxu0 0
        %1067 = vmatprep.subr.bf16.mxu0 0
        %1068 = vmatpush2.bf16.xpose.msra.mxu0 0
        %1069 = vmatprep.mubr.bf16.mxu0 0
        %1070 = vmatmul.mubr.bf16.gmra.mxu0 %v1032
        %v1071 = vpop.f32.mrf.mxu0
        %v1072 = vadd.f32 0.0, %v1071
        %v1073 = vpop.f32.mrf.mxu0
        %v1074 = vpop.f32.mrf.mxu0
        %v1075 = vpop.f32.mrf.mxu0
        %1076 = vdwg.mxu0
        %1077 = vrot.lane.b32.xlu0 %v907, 112
        %v1078 = vpop.permute.xlu0 %1077
        %v1080 = vsel %vm935, %v907, 0
        %v1083 = vsel %vm935, %v1078, 0
        %1085 = vmatprep.subr.bf16.mxu0 0
        %1086 = vmatpush1.bf16.xpose.msra.mxu0 0
        %1087 = vmatprep.subr.bf16.mxu0 0
        %1088 = vmatpush1.bf16.xpose.msra.mxu0 0
        %1089 = vmatprep.subr.bf16.mxu0 0
        %1090 = vmatpush1.bf16.xpose.msra.mxu0 0
        %1091 = vmatprep.subr.bf16.mxu0 0
        %1092 = vmatpush1.bf16.xpose.msra.mxu0 0
        %1093 = vmatprep.subr.bf16.mxu0 0
        %1094 = vmatpush1.bf16.xpose.msra.mxu0 0
        %1095 = vmatprep.subr.bf16.mxu0 0
        %1096 = vmatpush1.bf16.xpose.msra.mxu0 0
        %1097 = vmatprep.subr.bf16.mxu0 0
        %1098 = vmatpush1.bf16.xpose.msra.mxu0 0
        %1099 = vmatprep.subr.bf16.mxu0 0
        %1100 = vmatpush1.bf16.xpose.msra.mxu0 %v1083
        %1101 = vmatprep.subr.bf16.mxu0 0
        %1102 = vmatpush2.bf16.xpose.msra.mxu0 0
        %1103 = vmatprep.subr.bf16.mxu0 0
        %1104 = vmatpush2.bf16.xpose.msra.mxu0 0
        %1105 = vmatprep.subr.bf16.mxu0 0
        %1106 = vmatpush2.bf16.xpose.msra.mxu0 0
        %1107 = vmatprep.subr.bf16.mxu0 0
        %1108 = vmatpush2.bf16.xpose.msra.mxu0 0
        %1109 = vmatprep.subr.bf16.mxu0 0
        %1110 = vmatpush2.bf16.xpose.msra.mxu0 0
        %1111 = vmatprep.subr.bf16.mxu0 0
        %1112 = vmatpush2.bf16.xpose.msra.mxu0 0
        %1113 = vmatprep.subr.bf16.mxu0 0
        %1114 = vmatpush2.bf16.xpose.msra.mxu0 0
        %1115 = vmatprep.subr.bf16.mxu0 0
        %1116 = vmatpush2.bf16.xpose.msra.mxu0 0
        %1117 = vmatprep.mubr.bf16.mxu0 0
        %1118 = vmatmul.mubr.bf16.gmra.mxu0 %v1080
        %v1119 = vpop.f32.mrf.mxu0
        %v1120 = vadd.f32 0.0, %v1119
        %v1121 = vpop.f32.mrf.mxu0
        %v1122 = vpop.f32.mrf.mxu0
        %v1123 = vpop.f32.mrf.mxu0
        %1124 = vdwg.mxu0
        %1125 = vrot.lane.b32.xlu0 %v912, 112
        %v1126 = vpop.permute.xlu0 %1125
        %v1128 = vsel %vm935, %v912, 0
        %v1131 = vsel %vm935, %v1126, 0
        %1133 = vmatprep.subr.bf16.mxu0 0
        %1134 = vmatpush1.bf16.xpose.msra.mxu0 0
        %1135 = vmatprep.subr.bf16.mxu0 0
        %1136 = vmatpush1.bf16.xpose.msra.mxu0 0
        %1137 = vmatprep.subr.bf16.mxu0 0
        %1138 = vmatpush1.bf16.xpose.msra.mxu0 0
        %1139 = vmatprep.subr.bf16.mxu0 0
        %1140 = vmatpush1.bf16.xpose.msra.mxu0 0
        %1141 = vmatprep.subr.bf16.mxu0 0
        %1142 = vmatpush1.bf16.xpose.msra.mxu0 0
        %1143 = vmatprep.subr.bf16.mxu0 0
        %1144 = vmatpush1.bf16.xpose.msra.mxu0 0
        %1145 = vmatprep.subr.bf16.mxu0 0
        %1146 = vmatpush1.bf16.xpose.msra.mxu0 0
        %1147 = vmatprep.subr.bf16.mxu0 0
        %1148 = vmatpush1.bf16.xpose.msra.mxu0 %v1131
        %1149 = vmatprep.subr.bf16.mxu0 0
        %1150 = vmatpush2.bf16.xpose.msra.mxu0 0
        %1151 = vmatprep.subr.bf16.mxu0 0
        %1152 = vmatpush2.bf16.xpose.msra.mxu0 0
        %1153 = vmatprep.subr.bf16.mxu0 0
        %1154 = vmatpush2.bf16.xpose.msra.mxu0 0
        %1155 = vmatprep.subr.bf16.mxu0 0
        %1156 = vmatpush2.bf16.xpose.msra.mxu0 0
        %1157 = vmatprep.subr.bf16.mxu0 0
        %1158 = vmatpush2.bf16.xpose.msra.mxu0 0
        %1159 = vmatprep.subr.bf16.mxu0 0
        %1160 = vmatpush2.bf16.xpose.msra.mxu0 0
        %1161 = vmatprep.subr.bf16.mxu0 0
        %1162 = vmatpush2.bf16.xpose.msra.mxu0 0
        %1163 = vmatprep.subr.bf16.mxu0 0
        %1164 = vmatpush2.bf16.xpose.msra.mxu0 0
        %1165 = vmatprep.mubr.bf16.mxu0 0
        %1166 = vmatmul.mubr.bf16.gmra.mxu0 %v1128
        %v1167 = vpop.f32.mrf.mxu0
        %v1168 = vadd.f32 0.0, %v1167
        %v1169 = vpop.f32.mrf.mxu0
        %v1170 = vpop.f32.mrf.mxu0
        %v1171 = vpop.f32.mrf.mxu0
        %1172 = vdwg.mxu0
        %1173 = vrot.lane.b32.xlu0 %v920, 112
        %v1174 = vpop.permute.xlu0 %1173
        %v1176 = vsel %vm935, %v920, 0
        %v1179 = vsel %vm935, %v1174, 0
        %1181 = vmatprep.subr.bf16.mxu0 0
        %1182 = vmatpush1.bf16.xpose.msra.mxu0 0
        %1183 = vmatprep.subr.bf16.mxu0 0
        %1184 = vmatpush1.bf16.xpose.msra.mxu0 0
        %1185 = vmatprep.subr.bf16.mxu0 0
        %1186 = vmatpush1.bf16.xpose.msra.mxu0 0
        %1187 = vmatprep.subr.bf16.mxu0 0
        %1188 = vmatpush1.bf16.xpose.msra.mxu0 0
        %1189 = vmatprep.subr.bf16.mxu0 0
        %1190 = vmatpush1.bf16.xpose.msra.mxu0 0
        %1191 = vmatprep.subr.bf16.mxu0 0
        %1192 = vmatpush1.bf16.xpose.msra.mxu0 0
        %1193 = vmatprep.subr.bf16.mxu0 0
        %1194 = vmatpush1.bf16.xpose.msra.mxu0 0
        %1195 = vmatprep.subr.bf16.mxu0 0
        %1196 = vmatpush1.bf16.xpose.msra.mxu0 %v1179
        %1197 = vmatprep.subr.bf16.mxu0 0
        %1198 = vmatpush2.bf16.xpose.msra.mxu0 0
        %1199 = vmatprep.subr.bf16.mxu0 0
        %1200 = vmatpush2.bf16.xpose.msra.mxu0 0
        %1201 = vmatprep.subr.bf16.mxu0 0
        %1202 = vmatpush2.bf16.xpose.msra.mxu0 0
        %1203 = vmatprep.subr.bf16.mxu0 0
        %1204 = vmatpush2.bf16.xpose.msra.mxu0 0
        %1205 = vmatprep.subr.bf16.mxu0 0
        %1206 = vmatpush2.bf16.xpose.msra.mxu0 0
        %1207 = vmatprep.subr.bf16.mxu0 0
        %1208 = vmatpush2.bf16.xpose.msra.mxu0 0
        %1209 = vmatprep.subr.bf16.mxu0 0
        %1210 = vmatpush2.bf16.xpose.msra.mxu0 0
        %1211 = vmatprep.subr.bf16.mxu0 0
        %1212 = vmatpush2.bf16.xpose.msra.mxu0 0
        %1213 = vmatprep.mubr.bf16.mxu0 0
        %1214 = vmatmul.mubr.bf16.gmra.mxu0 %v1176
        %v1215 = vpop.f32.mrf.mxu0
        %v1216 = vadd.f32 0.0, %v1215
        %v1217 = vpop.f32.mrf.mxu0
        %v1218 = vpop.f32.mrf.mxu0
        %v1219 = vpop.f32.mrf.mxu0
        %1220 = vdwg.mxu0
        %1221 = vrot.lane.b32.xlu0 %v925, 112
        %v1222 = vpop.permute.xlu0 %1221
        %v1224 = vsel %vm935, %v925, 0
        %v1227 = vsel %vm935, %v1222, 0
        %1229 = vmatprep.subr.bf16.mxu0 0
        %1230 = vmatpush1.bf16.xpose.msra.mxu0 0
        %1231 = vmatprep.subr.bf16.mxu0 0
        %1232 = vmatpush1.bf16.xpose.msra.mxu0 0
        %1233 = vmatprep.subr.bf16.mxu0 0
        %1234 = vmatpush1.bf16.xpose.msra.mxu0 0
        %1235 = vmatprep.subr.bf16.mxu0 0
        %1236 = vmatpush1.bf16.xpose.msra.mxu0 0
        %1237 = vmatprep.subr.bf16.mxu0 0
        %1238 = vmatpush1.bf16.xpose.msra.mxu0 0
        %1239 = vmatprep.subr.bf16.mxu0 0
        %1240 = vmatpush1.bf16.xpose.msra.mxu0 0
        %1241 = vmatprep.subr.bf16.mxu0 0
        %1242 = vmatpush1.bf16.xpose.msra.mxu0 0
        %1243 = vmatprep.subr.bf16.mxu0 0
        %1244 = vmatpush1.bf16.xpose.msra.mxu0 %v1227
        %1245 = vmatprep.subr.bf16.mxu0 0
        %1246 = vmatpush2.bf16.xpose.msra.mxu0 0
        %1247 = vmatprep.subr.bf16.mxu0 0
        %1248 = vmatpush2.bf16.xpose.msra.mxu0 0
        %1249 = vmatprep.subr.bf16.mxu0 0
        %1250 = vmatpush2.bf16.xpose.msra.mxu0 0
        %1251 = vmatprep.subr.bf16.mxu0 0
        %1252 = vmatpush2.bf16.xpose.msra.mxu0 0
        %1253 = vmatprep.subr.bf16.mxu0 0
        %1254 = vmatpush2.bf16.xpose.msra.mxu0 0
        %1255 = vmatprep.subr.bf16.mxu0 0
        %1256 = vmatpush2.bf16.xpose.msra.mxu0 0
        %1257 = vmatprep.subr.bf16.mxu0 0
        %1258 = vmatpush2.bf16.xpose.msra.mxu0 0
        %1259 = vmatprep.subr.bf16.mxu0 0
        %1260 = vmatpush2.bf16.xpose.msra.mxu0 0
        %1261 = vmatprep.mubr.bf16.mxu0 0
        %1262 = vmatmul.mubr.bf16.gmra.mxu0 %v1224
        %v1263 = vpop.f32.mrf.mxu0
        %v1264 = vadd.f32 0.0, %v1263
        %v1265 = vpop.f32.mrf.mxu0
        %v1266 = vpop.f32.mrf.mxu0
        %v1267 = vpop.f32.mrf.mxu0
        %1268 = vdwg.mxu0
        %1269 = vrot.lane.b32.xlu0 %v932, 112
        %v1270 = vpop.permute.xlu0 %1269
        %v1272 = vsel %vm935, %v932, 0
        %v1275 = vsel %vm935, %v1270, 0
        %1277 = vmatprep.subr.bf16.mxu0 0
        %1278 = vmatpush1.bf16.xpose.msra.mxu0 0
        %1279 = vmatprep.subr.bf16.mxu0 0
        %1280 = vmatpush1.bf16.xpose.msra.mxu0 0
        %1281 = vmatprep.subr.bf16.mxu0 0
        %1282 = vmatpush1.bf16.xpose.msra.mxu0 0
        %1283 = vmatprep.subr.bf16.mxu0 0
        %1284 = vmatpush1.bf16.xpose.msra.mxu0 0
        %1285 = vmatprep.subr.bf16.mxu0 0
        %1286 = vmatpush1.bf16.xpose.msra.mxu0 0
        %1287 = vmatprep.subr.bf16.mxu0 0
        %1288 = vmatpush1.bf16.xpose.msra.mxu0 0
        %1289 = vmatprep.subr.bf16.mxu0 0
        %1290 = vmatpush1.bf16.xpose.msra.mxu0 0
        %1291 = vmatprep.subr.bf16.mxu0 0
        %1292 = vmatpush1.bf16.xpose.msra.mxu0 %v1275
        %1293 = vmatprep.subr.bf16.mxu0 0
        %1294 = vmatpush2.bf16.xpose.msra.mxu0 0
        %1295 = vmatprep.subr.bf16.mxu0 0
        %1296 = vmatpush2.bf16.xpose.msra.mxu0 0
        %1297 = vmatprep.subr.bf16.mxu0 0
        %1298 = vmatpush2.bf16.xpose.msra.mxu0 0
        %1299 = vmatprep.subr.bf16.mxu0 0
        %1300 = vmatpush2.bf16.xpose.msra.mxu0 0
        %1301 = vmatprep.subr.bf16.mxu0 0
        %1302 = vmatpush2.bf16.xpose.msra.mxu0 0
        %1303 = vmatprep.subr.bf16.mxu0 0
        %1304 = vmatpush2.bf16.xpose.msra.mxu0 0
        %1305 = vmatprep.subr.bf16.mxu0 0
        %1306 = vmatpush2.bf16.xpose.msra.mxu0 0
        %1307 = vmatprep.subr.bf16.mxu0 0
        %1308 = vmatpush2.bf16.xpose.msra.mxu0 0
        %1309 = vmatprep.mubr.bf16.mxu0 0
        %1310 = vmatmul.mubr.bf16.gmra.mxu0 %v1272
        %v1311 = vpop.f32.mrf.mxu0
        %v1312 = vadd.f32 0.0, %v1311
        %v1313 = vpop.f32.mrf.mxu0
        %v1314 = vpop.f32.mrf.mxu0
        %v1315 = vpop.f32.mrf.mxu0
        %1316 = vdwg.mxu0
        %vm1317 = vcmask 55296
        %v1318 = vsel %vm1317, %v976, -inf
        %1319 = vmax.xlane.f32.xlu0 %v1318
        %v1320 = vpop.xlane.xlu0 %1319
        %v1321 = vsel %vm1317, %v1024, -inf
        %1322 = vmax.xlane.f32.xlu0 %v1321
        %v1323 = vpop.xlane.xlu0 %1322
        %v1324 = vsel %vm1317, %v1072, -inf
        %1325 = vmax.xlane.f32.xlu0 %v1324
        %v1326 = vpop.xlane.xlu0 %1325
        %v1327 = vsel %vm1317, %v1120, -inf
        %1328 = vmax.xlane.f32.xlu0 %v1327
        %v1329 = vpop.xlane.xlu0 %1328
        %v1330 = vsel %vm1317, %v1168, -inf
        %1331 = vmax.xlane.f32.xlu0 %v1330
        %v1332 = vpop.xlane.xlu0 %1331
        %v1333 = vsel %vm1317, %v1216, -inf
        %1334 = vmax.xlane.f32.xlu0 %v1333
        %v1335 = vpop.xlane.xlu0 %1334
        %v1336 = vsel %vm1317, %v1264, -inf
        %1337 = vmax.xlane.f32.xlu0 %v1336
        %v1338 = vpop.xlane.xlu0 %1337
        %v1339 = vsel %vm1317, %v1312, -inf
        %1340 = vmax.xlane.f32.xlu0 %v1339
        %v1341 = vpop.xlane.xlu0 %1340
        %v1342 = vsub.f32 %v976, %v1320
        %v1343 = vsub.f32 %v1024, %v1323
        %v1344 = vsub.f32 %v1072, %v1326
        %v1345 = vsub.f32 %v1120, %v1329
        %v1346 = vsub.f32 %v1168, %v1332
        %v1347 = vsub.f32 %v1216, %v1335
        %v1348 = vsub.f32 %v1264, %v1338
        %v1349 = vsub.f32 %v1312, %v1341
        %v1350 = vmul.f32 %v1342, 1.442695
        %v1351 = vpow.pop %v1350
        %v1352 = vmul.f32 %v1343, 1.442695
        %v1353 = vpow.pop %v1352
        %v1354 = vmul.f32 %v1344, 1.442695
        %v1355 = vpow.pop %v1354
        %v1356 = vmul.f32 %v1345, 1.442695
        %v1357 = vpow.pop %v1356
        %v1358 = vmul.f32 %v1346, 1.442695
        %v1359 = vpow.pop %v1358
        %v1360 = vmul.f32 %v1347, 1.442695
        %v1361 = vpow.pop %v1360
        %v1362 = vmul.f32 %v1348, 1.442695
        %v1363 = vpow.pop %v1362
        %v1364 = vmul.f32 %v1349, 1.442695
        %v1365 = vpow.pop %v1364
        %v1366 = vsel %vm1317, %v1351, 0.0
        %1367 = vadd.xlane.f32.xlu0 %v1366
        %v1368 = vpop.xlane.xlu0 %1367
        %v1369 = vsel %vm1317, %v1353, 0.0
        %1370 = vadd.xlane.f32.xlu0 %v1369
        %v1371 = vpop.xlane.xlu0 %1370
        %v1372 = vsel %vm1317, %v1355, 0.0
        %1373 = vadd.xlane.f32.xlu0 %v1372
        %v1374 = vpop.xlane.xlu0 %1373
        %v1375 = vsel %vm1317, %v1357, 0.0
        %1376 = vadd.xlane.f32.xlu0 %v1375
        %v1377 = vpop.xlane.xlu0 %1376
        %v1378 = vsel %vm1317, %v1359, 0.0
        %1379 = vadd.xlane.f32.xlu0 %v1378
        %v1380 = vpop.xlane.xlu0 %1379
        %v1381 = vsel %vm1317, %v1361, 0.0
        %1382 = vadd.xlane.f32.xlu0 %v1381
        %v1383 = vpop.xlane.xlu0 %1382
        %v1384 = vsel %vm1317, %v1363, 0.0
        %1385 = vadd.xlane.f32.xlu0 %v1384
        %v1386 = vpop.xlane.xlu0 %1385
        %v1387 = vsel %vm1317, %v1365, 0.0
        %1388 = vadd.xlane.f32.xlu0 %v1387
        %v1389 = vpop.xlane.xlu0 %1388
        %v1390 = vrcp.pop %v1368
        %v1391 = vrcp.pop %v1371
        %v1392 = vrcp.pop %v1374
        %v1393 = vrcp.pop %v1377
        %v1394 = vrcp.pop %v1380
        %v1395 = vrcp.pop %v1383
        %v1396 = vrcp.pop %v1386
        %v1397 = vrcp.pop %v1389
        %v1398 = vmul.f32 %v1351, %v1390
        %v1399 = vmul.f32 %v1353, %v1391
        %v1400 = vmul.f32 %v1355, %v1392
        %v1401 = vmul.f32 %v1357, %v1393
        %v1402 = vmul.f32 %v1359, %v1394
        %v1403 = vmul.f32 %v1361, %v1395
        %v1404 = vmul.f32 %v1363, %v1396
        %v1405 = vmul.f32 %v1365, %v1397
        %v1406 = vpack.c.bf16 %v1398, %v1398
        %v1407 = vpack.c.bf16 %v1399, %v1399
        %v1408 = vpack.c.bf16 %v1400, %v1400
        %v1409 = vpack.c.bf16 %v1401, %v1401
        %v1410 = vpack.c.bf16 %v1402, %v1402
        %v1411 = vpack.c.bf16 %v1403, %v1403
        %v1412 = vpack.c.bf16 %v1404, %v1404
        %v1413 = vpack.c.bf16 %v1405, %v1405
        %1414 = vrot.lane.b32.xlu0 %v882, 96
        %v1415 = vpop.permute.xlu0 %1414
        %vm1416 = vcmask 56320
        %v1418 = vsel %vm1416, %v1406, 0
        %vm1420 = vcmask 1042432
        %vm1421 = vcmask 1043456
        %v1422 = vsel %vm1420, 4294967295, 65535
        %v1423 = vsel %vm1421, %v1422, 0
        %v1425 = vand.u32 %v1415, %v1423
        %1427 = vmatprep.subr.bf16.mxu0 0
        %1428 = vmatpush1.bf16.msra.mxu0 0
        %1429 = vmatprep.subr.bf16.mxu0 0
        %1430 = vmatpush1.bf16.msra.mxu0 0
        %1431 = vmatprep.subr.bf16.mxu0 0
        %1432 = vmatpush1.bf16.msra.mxu0 0
        %1433 = vmatprep.subr.bf16.mxu0 0
        %1434 = vmatpush1.bf16.msra.mxu0 0
        %1435 = vmatprep.subr.bf16.mxu0 0
        %1436 = vmatpush1.bf16.msra.mxu0 0
        %1437 = vmatprep.subr.bf16.mxu0 0
        %1438 = vmatpush1.bf16.msra.mxu0 0
        %1439 = vmatprep.subr.bf16.mxu0 0
        %1440 = vmatpush1.bf16.msra.mxu0 0
        %1441 = vmatprep.subr.bf16.mxu0 0
        %1442 = vmatpush1.bf16.msra.mxu0 %v1425
        %1443 = vmatprep.subr.bf16.mxu0 0
        %1444 = vmatpush2.bf16.msra.mxu0 0
        %1445 = vmatprep.subr.bf16.mxu0 0
        %1446 = vmatpush2.bf16.msra.mxu0 0
        %1447 = vmatprep.subr.bf16.mxu0 0
        %1448 = vmatpush2.bf16.msra.mxu0 0
        %1449 = vmatprep.subr.bf16.mxu0 0
        %1450 = vmatpush2.bf16.msra.mxu0 0
        %1451 = vmatprep.subr.bf16.mxu0 0
        %1452 = vmatpush2.bf16.msra.mxu0 0
        %1453 = vmatprep.subr.bf16.mxu0 0
        %1454 = vmatpush2.bf16.msra.mxu0 0
        %1455 = vmatprep.subr.bf16.mxu0 0
        %1456 = vmatpush2.bf16.msra.mxu0 0
        %1457 = vmatprep.subr.bf16.mxu0 0
        %1458 = vmatpush2.bf16.msra.mxu0 0
        %1459 = vmatprep.mubr.bf16.mxu0 0
        %1460 = vmatmul.mubr.bf16.gmra.mxu0 %v1418
        %v1461 = vpop.f32.mrf.mxu0
        %v1462 = vadd.f32 0.0, %v1461
        %v1463 = vpop.f32.mrf.mxu0
        %v1464 = vpop.f32.mrf.mxu0
        %v1465 = vpop.f32.mrf.mxu0
        %1466 = vdwg.mxu0
        %1467 = vrot.lane.b32.xlu0 %v893, 96
        %v1468 = vpop.permute.xlu0 %1467
        %v1470 = vsel %vm1416, %v1407, 0
        %v1473 = vand.u32 %v1468, %v1423
        %1475 = vmatprep.subr.bf16.mxu0 0
        %1476 = vmatpush1.bf16.msra.mxu0 0
        %1477 = vmatprep.subr.bf16.mxu0 0
        %1478 = vmatpush1.bf16.msra.mxu0 0
        %1479 = vmatprep.subr.bf16.mxu0 0
        %1480 = vmatpush1.bf16.msra.mxu0 0
        %1481 = vmatprep.subr.bf16.mxu0 0
        %1482 = vmatpush1.bf16.msra.mxu0 0
        %1483 = vmatprep.subr.bf16.mxu0 0
        %1484 = vmatpush1.bf16.msra.mxu0 0
        %1485 = vmatprep.subr.bf16.mxu0 0
        %1486 = vmatpush1.bf16.msra.mxu0 0
        %1487 = vmatprep.subr.bf16.mxu0 0
        %1488 = vmatpush1.bf16.msra.mxu0 0
        %1489 = vmatprep.subr.bf16.mxu0 0
        %1490 = vmatpush1.bf16.msra.mxu0 %v1473
        %1491 = vmatprep.subr.bf16.mxu0 0
        %1492 = vmatpush2.bf16.msra.mxu0 0
        %1493 = vmatprep.subr.bf16.mxu0 0
        %1494 = vmatpush2.bf16.msra.mxu0 0
        %1495 = vmatprep.subr.bf16.mxu0 0
        %1496 = vmatpush2.bf16.msra.mxu0 0
        %1497 = vmatprep.subr.bf16.mxu0 0
        %1498 = vmatpush2.bf16.msra.mxu0 0
        %1499 = vmatprep.subr.bf16.mxu0 0
        %1500 = vmatpush2.bf16.msra.mxu0 0
        %1501 = vmatprep.subr.bf16.mxu0 0
        %1502 = vmatpush2.bf16.msra.mxu0 0
        %1503 = vmatprep.subr.bf16.mxu0 0
        %1504 = vmatpush2.bf16.msra.mxu0 0
        %1505 = vmatprep.subr.bf16.mxu0 0
        %1506 = vmatpush2.bf16.msra.mxu0 0
        %1507 = vmatprep.mubr.bf16.mxu0 0
        %1508 = vmatmul.mubr.bf16.gmra.mxu0 %v1470
        %v1509 = vpop.f32.mrf.mxu0
        %v1510 = vadd.f32 0.0, %v1509
        %v1511 = vpop.f32.mrf.mxu0
        %v1512 = vpop.f32.mrf.mxu0
        %v1513 = vpop.f32.mrf.mxu0
        %1514 = vdwg.mxu0
        %1515 = vrot.lane.b32.xlu0 %v899, 96
        %v1516 = vpop.permute.xlu0 %1515
        %v1518 = vsel %vm1416, %v1408, 0
        %v1521 = vand.u32 %v1516, %v1423
        %1523 = vmatprep.subr.bf16.mxu0 0
        %1524 = vmatpush1.bf16.msra.mxu0 0
        %1525 = vmatprep.subr.bf16.mxu0 0
        %1526 = vmatpush1.bf16.msra.mxu0 0
        %1527 = vmatprep.subr.bf16.mxu0 0
        %1528 = vmatpush1.bf16.msra.mxu0 0
        %1529 = vmatprep.subr.bf16.mxu0 0
        %1530 = vmatpush1.bf16.msra.mxu0 0
        %1531 = vmatprep.subr.bf16.mxu0 0
        %1532 = vmatpush1.bf16.msra.mxu0 0
        %1533 = vmatprep.subr.bf16.mxu0 0
        %1534 = vmatpush1.bf16.msra.mxu0 0
        %1535 = vmatprep.subr.bf16.mxu0 0
        %1536 = vmatpush1.bf16.msra.mxu0 0
        %1537 = vmatprep.subr.bf16.mxu0 0
        %1538 = vmatpush1.bf16.msra.mxu0 %v1521
        %1539 = vmatprep.subr.bf16.mxu0 0
        %1540 = vmatpush2.bf16.msra.mxu0 0
        %1541 = vmatprep.subr.bf16.mxu0 0
        %1542 = vmatpush2.bf16.msra.mxu0 0
        %1543 = vmatprep.subr.bf16.mxu0 0
        %1544 = vmatpush2.bf16.msra.mxu0 0
        %1545 = vmatprep.subr.bf16.mxu0 0
        %1546 = vmatpush2.bf16.msra.mxu0 0
        %1547 = vmatprep.subr.bf16.mxu0 0
        %1548 = vmatpush2.bf16.msra.mxu0 0
        %1549 = vmatprep.subr.bf16.mxu0 0
        %1550 = vmatpush2.bf16.msra.mxu0 0
        %1551 = vmatprep.subr.bf16.mxu0 0
        %1552 = vmatpush2.bf16.msra.mxu0 0
        %1553 = vmatprep.subr.bf16.mxu0 0
        %1554 = vmatpush2.bf16.msra.mxu0 0
        %1555 = vmatprep.mubr.bf16.mxu0 0
        %1556 = vmatmul.mubr.bf16.gmra.mxu0 %v1518
        %v1557 = vpop.f32.mrf.mxu0
        %v1558 = vadd.f32 0.0, %v1557
        %v1559 = vpop.f32.mrf.mxu0
        %v1560 = vpop.f32.mrf.mxu0
        %v1561 = vpop.f32.mrf.mxu0
        %1562 = vdwg.mxu0
        %1563 = vrot.lane.b32.xlu0 %v907, 96
        %v1564 = vpop.permute.xlu0 %1563
        %v1566 = vsel %vm1416, %v1409, 0
        %v1569 = vand.u32 %v1564, %v1423
        %1571 = vmatprep.subr.bf16.mxu0 0
        %1572 = vmatpush1.bf16.msra.mxu0 0
        %1573 = vmatprep.subr.bf16.mxu0 0
        %1574 = vmatpush1.bf16.msra.mxu0 0
        %1575 = vmatprep.subr.bf16.mxu0 0
        %1576 = vmatpush1.bf16.msra.mxu0 0
        %1577 = vmatprep.subr.bf16.mxu0 0
        %1578 = vmatpush1.bf16.msra.mxu0 0
        %1579 = vmatprep.subr.bf16.mxu0 0
        %1580 = vmatpush1.bf16.msra.mxu0 0
        %1581 = vmatprep.subr.bf16.mxu0 0
        %1582 = vmatpush1.bf16.msra.mxu0 0
        %1583 = vmatprep.subr.bf16.mxu0 0
        %1584 = vmatpush1.bf16.msra.mxu0 0
        %1585 = vmatprep.subr.bf16.mxu0 0
        %1586 = vmatpush1.bf16.msra.mxu0 %v1569
        %1587 = vmatprep.subr.bf16.mxu0 0
        %1588 = vmatpush2.bf16.msra.mxu0 0
        %1589 = vmatprep.subr.bf16.mxu0 0
        %1590 = vmatpush2.bf16.msra.mxu0 0
        %1591 = vmatprep.subr.bf16.mxu0 0
        %1592 = vmatpush2.bf16.msra.mxu0 0
        %1593 = vmatprep.subr.bf16.mxu0 0
        %1594 = vmatpush2.bf16.msra.mxu0 0
        %1595 = vmatprep.subr.bf16.mxu0 0
        %1596 = vmatpush2.bf16.msra.mxu0 0
        %1597 = vmatprep.subr.bf16.mxu0 0
        %1598 = vmatpush2.bf16.msra.mxu0 0
        %1599 = vmatprep.subr.bf16.mxu0 0
        %1600 = vmatpush2.bf16.msra.mxu0 0
        %1601 = vmatprep.subr.bf16.mxu0 0
        %1602 = vmatpush2.bf16.msra.mxu0 0
        %1603 = vmatprep.mubr.bf16.mxu0 0
        %1604 = vmatmul.mubr.bf16.gmra.mxu0 %v1566
        %v1605 = vpop.f32.mrf.mxu0
        %v1606 = vadd.f32 0.0, %v1605
        %v1607 = vpop.f32.mrf.mxu0
        %v1608 = vpop.f32.mrf.mxu0
        %v1609 = vpop.f32.mrf.mxu0
        %1610 = vdwg.mxu0
        %1611 = vrot.lane.b32.xlu0 %v912, 96
        %v1612 = vpop.permute.xlu0 %1611
        %v1614 = vsel %vm1416, %v1410, 0
        %v1617 = vand.u32 %v1612, %v1423
        %1619 = vmatprep.subr.bf16.mxu0 0
        %1620 = vmatpush1.bf16.msra.mxu0 0
        %1621 = vmatprep.subr.bf16.mxu0 0
        %1622 = vmatpush1.bf16.msra.mxu0 0
        %1623 = vmatprep.subr.bf16.mxu0 0
        %1624 = vmatpush1.bf16.msra.mxu0 0
        %1625 = vmatprep.subr.bf16.mxu0 0
        %1626 = vmatpush1.bf16.msra.mxu0 0
        %1627 = vmatprep.subr.bf16.mxu0 0
        %1628 = vmatpush1.bf16.msra.mxu0 0
        %1629 = vmatprep.subr.bf16.mxu0 0
        %1630 = vmatpush1.bf16.msra.mxu0 0
        %1631 = vmatprep.subr.bf16.mxu0 0
        %1632 = vmatpush1.bf16.msra.mxu0 0
        %1633 = vmatprep.subr.bf16.mxu0 0
        %1634 = vmatpush1.bf16.msra.mxu0 %v1617
        %1635 = vmatprep.subr.bf16.mxu0 0
        %1636 = vmatpush2.bf16.msra.mxu0 0
        %1637 = vmatprep.subr.bf16.mxu0 0
        %1638 = vmatpush2.bf16.msra.mxu0 0
        %1639 = vmatprep.subr.bf16.mxu0 0
        %1640 = vmatpush2.bf16.msra.mxu0 0
        %1641 = vmatprep.subr.bf16.mxu0 0
        %1642 = vmatpush2.bf16.msra.mxu0 0
        %1643 = vmatprep.subr.bf16.mxu0 0
        %1644 = vmatpush2.bf16.msra.mxu0 0
        %1645 = vmatprep.subr.bf16.mxu0 0
        %1646 = vmatpush2.bf16.msra.mxu0 0
        %1647 = vmatprep.subr.bf16.mxu0 0
        %1648 = vmatpush2.bf16.msra.mxu0 0
        %1649 = vmatprep.subr.bf16.mxu0 0
        %1650 = vmatpush2.bf16.msra.mxu0 0
        %1651 = vmatprep.mubr.bf16.mxu0 0
        %1652 = vmatmul.mubr.bf16.gmra.mxu0 %v1614
        %v1653 = vpop.f32.mrf.mxu0
        %v1654 = vadd.f32 0.0, %v1653
        %v1655 = vpop.f32.mrf.mxu0
        %v1656 = vpop.f32.mrf.mxu0
        %v1657 = vpop.f32.mrf.mxu0
        %1658 = vdwg.mxu0
        %1659 = vrot.lane.b32.xlu0 %v920, 96
        %v1660 = vpop.permute.xlu0 %1659
        %v1662 = vsel %vm1416, %v1411, 0
        %v1665 = vand.u32 %v1660, %v1423
        %1667 = vmatprep.subr.bf16.mxu0 0
        %1668 = vmatpush1.bf16.msra.mxu0 0
        %1669 = vmatprep.subr.bf16.mxu0 0
        %1670 = vmatpush1.bf16.msra.mxu0 0
        %1671 = vmatprep.subr.bf16.mxu0 0
        %1672 = vmatpush1.bf16.msra.mxu0 0
        %1673 = vmatprep.subr.bf16.mxu0 0
        %1674 = vmatpush1.bf16.msra.mxu0 0
        %1675 = vmatprep.subr.bf16.mxu0 0
        %1676 = vmatpush1.bf16.msra.mxu0 0
        %1677 = vmatprep.subr.bf16.mxu0 0
        %1678 = vmatpush1.bf16.msra.mxu0 0
        %1679 = vmatprep.subr.bf16.mxu0 0
        %1680 = vmatpush1.bf16.msra.mxu0 0
        %1681 = vmatprep.subr.bf16.mxu0 0
        %1682 = vmatpush1.bf16.msra.mxu0 %v1665
        %1683 = vmatprep.subr.bf16.mxu0 0
        %1684 = vmatpush2.bf16.msra.mxu0 0
        %1685 = vmatprep.subr.bf16.mxu0 0
        %1686 = vmatpush2.bf16.msra.mxu0 0
        %1687 = vmatprep.subr.bf16.mxu0 0
        %1688 = vmatpush2.bf16.msra.mxu0 0
        %1689 = vmatprep.subr.bf16.mxu0 0
        %1690 = vmatpush2.bf16.msra.mxu0 0
        %1691 = vmatprep.subr.bf16.mxu0 0
        %1692 = vmatpush2.bf16.msra.mxu0 0
        %1693 = vmatprep.subr.bf16.mxu0 0
        %1694 = vmatpush2.bf16.msra.mxu0 0
        %1695 = vmatprep.subr.bf16.mxu0 0
        %1696 = vmatpush2.bf16.msra.mxu0 0
        %1697 = vmatprep.subr.bf16.mxu0 0
        %1698 = vmatpush2.bf16.msra.mxu0 0
        %1699 = vmatprep.mubr.bf16.mxu0 0
        %1700 = vmatmul.mubr.bf16.gmra.mxu0 %v1662
        %v1701 = vpop.f32.mrf.mxu0
        %v1702 = vadd.f32 0.0, %v1701
        %v1703 = vpop.f32.mrf.mxu0
        %v1704 = vpop.f32.mrf.mxu0
        %v1705 = vpop.f32.mrf.mxu0
        %1706 = vdwg.mxu0
        %1707 = vrot.lane.b32.xlu0 %v925, 96
        %v1708 = vpop.permute.xlu0 %1707
        %v1710 = vsel %vm1416, %v1412, 0
        %v1713 = vand.u32 %v1708, %v1423
        %1715 = vmatprep.subr.bf16.mxu0 0
        %1716 = vmatpush1.bf16.msra.mxu0 0
        %1717 = vmatprep.subr.bf16.mxu0 0
        %1718 = vmatpush1.bf16.msra.mxu0 0
        %1719 = vmatprep.subr.bf16.mxu0 0
        %1720 = vmatpush1.bf16.msra.mxu0 0
        %1721 = vmatprep.subr.bf16.mxu0 0
        %1722 = vmatpush1.bf16.msra.mxu0 0
        %1723 = vmatprep.subr.bf16.mxu0 0
        %1724 = vmatpush1.bf16.msra.mxu0 0
        %1725 = vmatprep.subr.bf16.mxu0 0
        %1726 = vmatpush1.bf16.msra.mxu0 0
        %1727 = vmatprep.subr.bf16.mxu0 0
        %1728 = vmatpush1.bf16.msra.mxu0 0
        %1729 = vmatprep.subr.bf16.mxu0 0
        %1730 = vmatpush1.bf16.msra.mxu0 %v1713
        %1731 = vmatprep.subr.bf16.mxu0 0
        %1732 = vmatpush2.bf16.msra.mxu0 0
        %1733 = vmatprep.subr.bf16.mxu0 0
        %1734 = vmatpush2.bf16.msra.mxu0 0
        %1735 = vmatprep.subr.bf16.mxu0 0
        %1736 = vmatpush2.bf16.msra.mxu0 0
        %1737 = vmatprep.subr.bf16.mxu0 0
        %1738 = vmatpush2.bf16.msra.mxu0 0
        %1739 = vmatprep.subr.bf16.mxu0 0
        %1740 = vmatpush2.bf16.msra.mxu0 0
        %1741 = vmatprep.subr.bf16.mxu0 0
        %1742 = vmatpush2.bf16.msra.mxu0 0
        %1743 = vmatprep.subr.bf16.mxu0 0
        %1744 = vmatpush2.bf16.msra.mxu0 0
        %1745 = vmatprep.subr.bf16.mxu0 0
        %1746 = vmatpush2.bf16.msra.mxu0 0
        %1747 = vmatprep.mubr.bf16.mxu0 0
        %1748 = vmatmul.mubr.bf16.gmra.mxu0 %v1710
        %v1749 = vpop.f32.mrf.mxu0
        %v1750 = vadd.f32 0.0, %v1749
        %v1751 = vpop.f32.mrf.mxu0
        %v1752 = vpop.f32.mrf.mxu0
        %v1753 = vpop.f32.mrf.mxu0
        %1754 = vdwg.mxu0
        %1755 = vrot.lane.b32.xlu0 %v932, 96
        %v1756 = vpop.permute.xlu0 %1755
        %v1758 = vsel %vm1416, %v1413, 0
        %v1761 = vand.u32 %v1756, %v1423
        %1763 = vmatprep.subr.bf16.mxu0 0
        %1764 = vmatpush1.bf16.msra.mxu0 0
        %1765 = vmatprep.subr.bf16.mxu0 0
        %1766 = vmatpush1.bf16.msra.mxu0 0
        %1767 = vmatprep.subr.bf16.mxu0 0
        %1768 = vmatpush1.bf16.msra.mxu0 0
        %1769 = vmatprep.subr.bf16.mxu0 0
        %1770 = vmatpush1.bf16.msra.mxu0 0
        %1771 = vmatprep.subr.bf16.mxu0 0
        %1772 = vmatpush1.bf16.msra.mxu0 0
        %1773 = vmatprep.subr.bf16.mxu0 0
        %1774 = vmatpush1.bf16.msra.mxu0 0
        %1775 = vmatprep.subr.bf16.mxu0 0
        %1776 = vmatpush1.bf16.msra.mxu0 0
        %1777 = vmatprep.subr.bf16.mxu0 0
        %1778 = vmatpush1.bf16.msra.mxu0 %v1761
        %1779 = vmatprep.subr.bf16.mxu0 0
        %1780 = vmatpush2.bf16.msra.mxu0 0
        %1781 = vmatprep.subr.bf16.mxu0 0
        %1782 = vmatpush2.bf16.msra.mxu0 0
        %1783 = vmatprep.subr.bf16.mxu0 0
        %1784 = vmatpush2.bf16.msra.mxu0 0
        %1785 = vmatprep.subr.bf16.mxu0 0
        %1786 = vmatpush2.bf16.msra.mxu0 0
        %1787 = vmatprep.subr.bf16.mxu0 0
        %1788 = vmatpush2.bf16.msra.mxu0 0
        %1789 = vmatprep.subr.bf16.mxu0 0
        %1790 = vmatpush2.bf16.msra.mxu0 0
        %1791 = vmatprep.subr.bf16.mxu0 0
        %1792 = vmatpush2.bf16.msra.mxu0 0
        %1793 = vmatprep.subr.bf16.mxu0 0
        %1794 = vmatpush2.bf16.msra.mxu0 0
        %1795 = vmatprep.mubr.bf16.mxu0 0
        %1796 = vmatmul.mubr.bf16.gmra.mxu0 %v1758
        %v1797 = vpop.f32.mrf.mxu0
        %v1798 = vadd.f32 0.0, %v1797
        %v1799 = vpop.f32.mrf.mxu0
        %v1800 = vpop.f32.mrf.mxu0
        %v1801 = vpop.f32.mrf.mxu0
        %1802 = vdwg.mxu0
        %v1803 = vpack.c.bf16 %v1462, %v1462
        %v1804 = vpack.c.bf16 %v1510, %v1510
        %v1805 = vpack.c.bf16 %v1558, %v1558
        %v1806 = vpack.c.bf16 %v1606, %v1606
        %v1807 = vpack.c.bf16 %v1654, %v1654
        %v1808 = vpack.c.bf16 %v1702, %v1702
        %v1809 = vpack.c.bf16 %v1750, %v1750
        %v1810 = vpack.c.bf16 %v1798, %v1798
        %1811 = vrot.lane.b32.xlu0 %v882, 120
        %v1812 = vpop.permute.xlu0 %1811
        %1813 = vrot.lane.b32.xlu0 %v882, 104
        %v1814 = vpop.permute.xlu0 %1813
        %v1816 = vsel %vm935, %v1812, 0
        %v1819 = vsel %vm935, %v1814, 0
        %1821 = vmatprep.subr.bf16.mxu0 0
        %1822 = vmatpush1.bf16.xpose.msra.mxu0 0
        %1823 = vmatprep.subr.bf16.mxu0 0
        %1824 = vmatpush1.bf16.xpose.msra.mxu0 0
        %1825 = vmatprep.subr.bf16.mxu0 0
        %1826 = vmatpush1.bf16.xpose.msra.mxu0 0
        %1827 = vmatprep.subr.bf16.mxu0 0
        %1828 = vmatpush1.bf16.xpose.msra.mxu0 0
        %1829 = vmatprep.subr.bf16.mxu0 0
        %1830 = vmatpush1.bf16.xpose.msra.mxu0 0
        %1831 = vmatprep.subr.bf16.mxu0 0
        %1832 = vmatpush1.bf16.xpose.msra.mxu0 0
        %1833 = vmatprep.subr.bf16.mxu0 0
        %1834 = vmatpush1.bf16.xpose.msra.mxu0 0
        %1835 = vmatprep.subr.bf16.mxu0 0
        %1836 = vmatpush1.bf16.xpose.msra.mxu0 %v1819
        %1837 = vmatprep.subr.bf16.mxu0 0
        %1838 = vmatpush2.bf16.xpose.msra.mxu0 0
        %1839 = vmatprep.subr.bf16.mxu0 0
        %1840 = vmatpush2.bf16.xpose.msra.mxu0 0
        %1841 = vmatprep.subr.bf16.mxu0 0
        %1842 = vmatpush2.bf16.xpose.msra.mxu0 0
        %1843 = vmatprep.subr.bf16.mxu0 0
        %1844 = vmatpush2.bf16.xpose.msra.mxu0 0
        %1845 = vmatprep.subr.bf16.mxu0 0
        %1846 = vmatpush2.bf16.xpose.msra.mxu0 0
        %1847 = vmatprep.subr.bf16.mxu0 0
        %1848 = vmatpush2.bf16.xpose.msra.mxu0 0
        %1849 = vmatprep.subr.bf16.mxu0 0
        %1850 = vmatpush2.bf16.xpose.msra.mxu0 0
        %1851 = vmatprep.subr.bf16.mxu0 0
        %1852 = vmatpush2.bf16.xpose.msra.mxu0 0
        %1853 = vmatprep.mubr.bf16.mxu0 0
        %1854 = vmatmul.mubr.bf16.gmra.mxu0 %v1816
        %v1855 = vpop.f32.mrf.mxu0
        %v1856 = vadd.f32 0.0, %v1855
        %v1857 = vpop.f32.mrf.mxu0
        %v1858 = vpop.f32.mrf.mxu0
        %v1859 = vpop.f32.mrf.mxu0
        %1860 = vdwg.mxu0
        %1861 = vrot.lane.b32.xlu0 %v893, 120
        %v1862 = vpop.permute.xlu0 %1861
        %1863 = vrot.lane.b32.xlu0 %v893, 104
        %v1864 = vpop.permute.xlu0 %1863
        %v1866 = vsel %vm935, %v1862, 0
        %v1869 = vsel %vm935, %v1864, 0
        %1871 = vmatprep.subr.bf16.mxu0 0
        %1872 = vmatpush1.bf16.xpose.msra.mxu0 0
        %1873 = vmatprep.subr.bf16.mxu0 0
        %1874 = vmatpush1.bf16.xpose.msra.mxu0 0
        %1875 = vmatprep.subr.bf16.mxu0 0
        %1876 = vmatpush1.bf16.xpose.msra.mxu0 0
        %1877 = vmatprep.subr.bf16.mxu0 0
        %1878 = vmatpush1.bf16.xpose.msra.mxu0 0
        %1879 = vmatprep.subr.bf16.mxu0 0
        %1880 = vmatpush1.bf16.xpose.msra.mxu0 0
        %1881 = vmatprep.subr.bf16.mxu0 0
        %1882 = vmatpush1.bf16.xpose.msra.mxu0 0
        %1883 = vmatprep.subr.bf16.mxu0 0
        %1884 = vmatpush1.bf16.xpose.msra.mxu0 0
        %1885 = vmatprep.subr.bf16.mxu0 0
        %1886 = vmatpush1.bf16.xpose.msra.mxu0 %v1869
        %1887 = vmatprep.subr.bf16.mxu0 0
        %1888 = vmatpush2.bf16.xpose.msra.mxu0 0
        %1889 = vmatprep.subr.bf16.mxu0 0
        %1890 = vmatpush2.bf16.xpose.msra.mxu0 0
        %1891 = vmatprep.subr.bf16.mxu0 0
        %1892 = vmatpush2.bf16.xpose.msra.mxu0 0
        %1893 = vmatprep.subr.bf16.mxu0 0
        %1894 = vmatpush2.bf16.xpose.msra.mxu0 0
        %1895 = vmatprep.subr.bf16.mxu0 0
        %1896 = vmatpush2.bf16.xpose.msra.mxu0 0
        %1897 = vmatprep.subr.bf16.mxu0 0
        %1898 = vmatpush2.bf16.xpose.msra.mxu0 0
        %1899 = vmatprep.subr.bf16.mxu0 0
        %1900 = vmatpush2.bf16.xpose.msra.mxu0 0
        %1901 = vmatprep.subr.bf16.mxu0 0
        %1902 = vmatpush2.bf16.xpose.msra.mxu0 0
        %1903 = vmatprep.mubr.bf16.mxu0 0
        %1904 = vmatmul.mubr.bf16.gmra.mxu0 %v1866
        %v1905 = vpop.f32.mrf.mxu0
        %v1906 = vadd.f32 0.0, %v1905
        %v1907 = vpop.f32.mrf.mxu0
        %v1908 = vpop.f32.mrf.mxu0
        %v1909 = vpop.f32.mrf.mxu0
        %1910 = vdwg.mxu0
        %1911 = vrot.lane.b32.xlu0 %v899, 120
        %v1912 = vpop.permute.xlu0 %1911
        %1913 = vrot.lane.b32.xlu0 %v899, 104
        %v1914 = vpop.permute.xlu0 %1913
        %v1916 = vsel %vm935, %v1912, 0
        %v1919 = vsel %vm935, %v1914, 0
        %1921 = vmatprep.subr.bf16.mxu0 0
        %1922 = vmatpush1.bf16.xpose.msra.mxu0 0
        %1923 = vmatprep.subr.bf16.mxu0 0
        %1924 = vmatpush1.bf16.xpose.msra.mxu0 0
        %1925 = vmatprep.subr.bf16.mxu0 0
        %1926 = vmatpush1.bf16.xpose.msra.mxu0 0
        %1927 = vmatprep.subr.bf16.mxu0 0
        %1928 = vmatpush1.bf16.xpose.msra.mxu0 0
        %1929 = vmatprep.subr.bf16.mxu0 0
        %1930 = vmatpush1.bf16.xpose.msra.mxu0 0
        %1931 = vmatprep.subr.bf16.mxu0 0
        %1932 = vmatpush1.bf16.xpose.msra.mxu0 0
        %1933 = vmatprep.subr.bf16.mxu0 0
        %1934 = vmatpush1.bf16.xpose.msra.mxu0 0
        %1935 = vmatprep.subr.bf16.mxu0 0
        %1936 = vmatpush1.bf16.xpose.msra.mxu0 %v1919
        %1937 = vmatprep.subr.bf16.mxu0 0
        %1938 = vmatpush2.bf16.xpose.msra.mxu0 0
        %1939 = vmatprep.subr.bf16.mxu0 0
        %1940 = vmatpush2.bf16.xpose.msra.mxu0 0
        %1941 = vmatprep.subr.bf16.mxu0 0
        %1942 = vmatpush2.bf16.xpose.msra.mxu0 0
        %1943 = vmatprep.subr.bf16.mxu0 0
        %1944 = vmatpush2.bf16.xpose.msra.mxu0 0
        %1945 = vmatprep.subr.bf16.mxu0 0
        %1946 = vmatpush2.bf16.xpose.msra.mxu0 0
        %1947 = vmatprep.subr.bf16.mxu0 0
        %1948 = vmatpush2.bf16.xpose.msra.mxu0 0
        %1949 = vmatprep.subr.bf16.mxu0 0
        %1950 = vmatpush2.bf16.xpose.msra.mxu0 0
        %1951 = vmatprep.subr.bf16.mxu0 0
        %1952 = vmatpush2.bf16.xpose.msra.mxu0 0
        %1953 = vmatprep.mubr.bf16.mxu0 0
        %1954 = vmatmul.mubr.bf16.gmra.mxu0 %v1916
        %v1955 = vpop.f32.mrf.mxu0
        %v1956 = vadd.f32 0.0, %v1955
        %v1957 = vpop.f32.mrf.mxu0
        %v1958 = vpop.f32.mrf.mxu0
        %v1959 = vpop.f32.mrf.mxu0
        %1960 = vdwg.mxu0
        %1961 = vrot.lane.b32.xlu0 %v907, 120
        %v1962 = vpop.permute.xlu0 %1961
        %1963 = vrot.lane.b32.xlu0 %v907, 104
        %v1964 = vpop.permute.xlu0 %1963
        %v1966 = vsel %vm935, %v1962, 0
        %v1969 = vsel %vm935, %v1964, 0
        %1971 = vmatprep.subr.bf16.mxu0 0
        %1972 = vmatpush1.bf16.xpose.msra.mxu0 0
        %1973 = vmatprep.subr.bf16.mxu0 0
        %1974 = vmatpush1.bf16.xpose.msra.mxu0 0
        %1975 = vmatprep.subr.bf16.mxu0 0
        %1976 = vmatpush1.bf16.xpose.msra.mxu0 0
        %1977 = vmatprep.subr.bf16.mxu0 0
        %1978 = vmatpush1.bf16.xpose.msra.mxu0 0
        %1979 = vmatprep.subr.bf16.mxu0 0
        %1980 = vmatpush1.bf16.xpose.msra.mxu0 0
        %1981 = vmatprep.subr.bf16.mxu0 0
        %1982 = vmatpush1.bf16.xpose.msra.mxu0 0
        %1983 = vmatprep.subr.bf16.mxu0 0
        %1984 = vmatpush1.bf16.xpose.msra.mxu0 0
        %1985 = vmatprep.subr.bf16.mxu0 0
        %1986 = vmatpush1.bf16.xpose.msra.mxu0 %v1969
        %1987 = vmatprep.subr.bf16.mxu0 0
        %1988 = vmatpush2.bf16.xpose.msra.mxu0 0
        %1989 = vmatprep.subr.bf16.mxu0 0
        %1990 = vmatpush2.bf16.xpose.msra.mxu0 0
        %1991 = vmatprep.subr.bf16.mxu0 0
        %1992 = vmatpush2.bf16.xpose.msra.mxu0 0
        %1993 = vmatprep.subr.bf16.mxu0 0
        %1994 = vmatpush2.bf16.xpose.msra.mxu0 0
        %1995 = vmatprep.subr.bf16.mxu0 0
        %1996 = vmatpush2.bf16.xpose.msra.mxu0 0
        %1997 = vmatprep.subr.bf16.mxu0 0
        %1998 = vmatpush2.bf16.xpose.msra.mxu0 0
        %1999 = vmatprep.subr.bf16.mxu0 0
        %2000 = vmatpush2.bf16.xpose.msra.mxu0 0
        %2001 = vmatprep.subr.bf16.mxu0 0
        %2002 = vmatpush2.bf16.xpose.msra.mxu0 0
        %2003 = vmatprep.mubr.bf16.mxu0 0
        %2004 = vmatmul.mubr.bf16.gmra.mxu0 %v1966
        %v2005 = vpop.f32.mrf.mxu0
        %v2006 = vadd.f32 0.0, %v2005
        %v2007 = vpop.f32.mrf.mxu0
        %v2008 = vpop.f32.mrf.mxu0
        %v2009 = vpop.f32.mrf.mxu0
        %2010 = vdwg.mxu0
        %2011 = vrot.lane.b32.xlu0 %v912, 120
        %v2012 = vpop.permute.xlu0 %2011
        %2013 = vrot.lane.b32.xlu0 %v912, 104
        %v2014 = vpop.permute.xlu0 %2013
        %v2016 = vsel %vm935, %v2012, 0
        %v2019 = vsel %vm935, %v2014, 0
        %2021 = vmatprep.subr.bf16.mxu0 0
        %2022 = vmatpush1.bf16.xpose.msra.mxu0 0
        %2023 = vmatprep.subr.bf16.mxu0 0
        %2024 = vmatpush1.bf16.xpose.msra.mxu0 0
        %2025 = vmatprep.subr.bf16.mxu0 0
        %2026 = vmatpush1.bf16.xpose.msra.mxu0 0
        %2027 = vmatprep.subr.bf16.mxu0 0
        %2028 = vmatpush1.bf16.xpose.msra.mxu0 0
        %2029 = vmatprep.subr.bf16.mxu0 0
        %2030 = vmatpush1.bf16.xpose.msra.mxu0 0
        %2031 = vmatprep.subr.bf16.mxu0 0
        %2032 = vmatpush1.bf16.xpose.msra.mxu0 0
        %2033 = vmatprep.subr.bf16.mxu0 0
        %2034 = vmatpush1.bf16.xpose.msra.mxu0 0
        %2035 = vmatprep.subr.bf16.mxu0 0
        %2036 = vmatpush1.bf16.xpose.msra.mxu0 %v2019
        %2037 = vmatprep.subr.bf16.mxu0 0
        %2038 = vmatpush2.bf16.xpose.msra.mxu0 0
        %2039 = vmatprep.subr.bf16.mxu0 0
        %2040 = vmatpush2.bf16.xpose.msra.mxu0 0
        %2041 = vmatprep.subr.bf16.mxu0 0
        %2042 = vmatpush2.bf16.xpose.msra.mxu0 0
        %2043 = vmatprep.subr.bf16.mxu0 0
        %2044 = vmatpush2.bf16.xpose.msra.mxu0 0
        %2045 = vmatprep.subr.bf16.mxu0 0
        %2046 = vmatpush2.bf16.xpose.msra.mxu0 0
        %2047 = vmatprep.subr.bf16.mxu0 0
        %2048 = vmatpush2.bf16.xpose.msra.mxu0 0
        %2049 = vmatprep.subr.bf16.mxu0 0
        %2050 = vmatpush2.bf16.xpose.msra.mxu0 0
        %2051 = vmatprep.subr.bf16.mxu0 0
        %2052 = vmatpush2.bf16.xpose.msra.mxu0 0
        %2053 = vmatprep.mubr.bf16.mxu0 0
        %2054 = vmatmul.mubr.bf16.gmra.mxu0 %v2016
        %v2055 = vpop.f32.mrf.mxu0
        %v2056 = vadd.f32 0.0, %v2055
        %v2057 = vpop.f32.mrf.mxu0
        %v2058 = vpop.f32.mrf.mxu0
        %v2059 = vpop.f32.mrf.mxu0
        %2060 = vdwg.mxu0
        %2061 = vrot.lane.b32.xlu0 %v920, 120
        %v2062 = vpop.permute.xlu0 %2061
        %2063 = vrot.lane.b32.xlu0 %v920, 104
        %v2064 = vpop.permute.xlu0 %2063
        %v2066 = vsel %vm935, %v2062, 0
        %v2069 = vsel %vm935, %v2064, 0
        %2071 = vmatprep.subr.bf16.mxu0 0
        %2072 = vmatpush1.bf16.xpose.msra.mxu0 0
        %2073 = vmatprep.subr.bf16.mxu0 0
        %2074 = vmatpush1.bf16.xpose.msra.mxu0 0
        %2075 = vmatprep.subr.bf16.mxu0 0
        %2076 = vmatpush1.bf16.xpose.msra.mxu0 0
        %2077 = vmatprep.subr.bf16.mxu0 0
        %2078 = vmatpush1.bf16.xpose.msra.mxu0 0
        %2079 = vmatprep.subr.bf16.mxu0 0
        %2080 = vmatpush1.bf16.xpose.msra.mxu0 0
        %2081 = vmatprep.subr.bf16.mxu0 0
        %2082 = vmatpush1.bf16.xpose.msra.mxu0 0
        %2083 = vmatprep.subr.bf16.mxu0 0
        %2084 = vmatpush1.bf16.xpose.msra.mxu0 0
        %2085 = vmatprep.subr.bf16.mxu0 0
        %2086 = vmatpush1.bf16.xpose.msra.mxu0 %v2069
        %2087 = vmatprep.subr.bf16.mxu0 0
        %2088 = vmatpush2.bf16.xpose.msra.mxu0 0
        %2089 = vmatprep.subr.bf16.mxu0 0
        %2090 = vmatpush2.bf16.xpose.msra.mxu0 0
        %2091 = vmatprep.subr.bf16.mxu0 0
        %2092 = vmatpush2.bf16.xpose.msra.mxu0 0
        %2093 = vmatprep.subr.bf16.mxu0 0
        %2094 = vmatpush2.bf16.xpose.msra.mxu0 0
        %2095 = vmatprep.subr.bf16.mxu0 0
        %2096 = vmatpush2.bf16.xpose.msra.mxu0 0
        %2097 = vmatprep.subr.bf16.mxu0 0
        %2098 = vmatpush2.bf16.xpose.msra.mxu0 0
        %2099 = vmatprep.subr.bf16.mxu0 0
        %2100 = vmatpush2.bf16.xpose.msra.mxu0 0
        %2101 = vmatprep.subr.bf16.mxu0 0
        %2102 = vmatpush2.bf16.xpose.msra.mxu0 0
        %2103 = vmatprep.mubr.bf16.mxu0 0
        %2104 = vmatmul.mubr.bf16.gmra.mxu0 %v2066
        %v2105 = vpop.f32.mrf.mxu0
        %v2106 = vadd.f32 0.0, %v2105
        %v2107 = vpop.f32.mrf.mxu0
        %v2108 = vpop.f32.mrf.mxu0
        %v2109 = vpop.f32.mrf.mxu0
        %2110 = vdwg.mxu0
        %2111 = vrot.lane.b32.xlu0 %v925, 120
        %v2112 = vpop.permute.xlu0 %2111
        %2113 = vrot.lane.b32.xlu0 %v925, 104
        %v2114 = vpop.permute.xlu0 %2113
        %v2116 = vsel %vm935, %v2112, 0
        %v2119 = vsel %vm935, %v2114, 0
        %2121 = vmatprep.subr.bf16.mxu0 0
        %2122 = vmatpush1.bf16.xpose.msra.mxu0 0
        %2123 = vmatprep.subr.bf16.mxu0 0
        %2124 = vmatpush1.bf16.xpose.msra.mxu0 0
        %2125 = vmatprep.subr.bf16.mxu0 0
        %2126 = vmatpush1.bf16.xpose.msra.mxu0 0
        %2127 = vmatprep.subr.bf16.mxu0 0
        %2128 = vmatpush1.bf16.xpose.msra.mxu0 0
        %2129 = vmatprep.subr.bf16.mxu0 0
        %2130 = vmatpush1.bf16.xpose.msra.mxu0 0
        %2131 = vmatprep.subr.bf16.mxu0 0
        %2132 = vmatpush1.bf16.xpose.msra.mxu0 0
        %2133 = vmatprep.subr.bf16.mxu0 0
        %2134 = vmatpush1.bf16.xpose.msra.mxu0 0
        %2135 = vmatprep.subr.bf16.mxu0 0
        %2136 = vmatpush1.bf16.xpose.msra.mxu0 %v2119
        %2137 = vmatprep.subr.bf16.mxu0 0
        %2138 = vmatpush2.bf16.xpose.msra.mxu0 0
        %2139 = vmatprep.subr.bf16.mxu0 0
        %2140 = vmatpush2.bf16.xpose.msra.mxu0 0
        %2141 = vmatprep.subr.bf16.mxu0 0
        %2142 = vmatpush2.bf16.xpose.msra.mxu0 0
        %2143 = vmatprep.subr.bf16.mxu0 0
        %2144 = vmatpush2.bf16.xpose.msra.mxu0 0
        %2145 = vmatprep.subr.bf16.mxu0 0
        %2146 = vmatpush2.bf16.xpose.msra.mxu0 0
        %2147 = vmatprep.subr.bf16.mxu0 0
        %2148 = vmatpush2.bf16.xpose.msra.mxu0 0
        %2149 = vmatprep.subr.bf16.mxu0 0
        %2150 = vmatpush2.bf16.xpose.msra.mxu0 0
        %2151 = vmatprep.subr.bf16.mxu0 0
        %2152 = vmatpush2.bf16.xpose.msra.mxu0 0
        %2153 = vmatprep.mubr.bf16.mxu0 0
        %2154 = vmatmul.mubr.bf16.gmra.mxu0 %v2116
        %v2155 = vpop.f32.mrf.mxu0
        %v2156 = vadd.f32 0.0, %v2155
        %v2157 = vpop.f32.mrf.mxu0
        %v2158 = vpop.f32.mrf.mxu0
        %v2159 = vpop.f32.mrf.mxu0
        %2160 = vdwg.mxu0
        %2161 = vrot.lane.b32.xlu0 %v932, 120
        %v2162 = vpop.permute.xlu0 %2161
        %2163 = vrot.lane.b32.xlu0 %v932, 104
        %v2164 = vpop.permute.xlu0 %2163
        %v2166 = vsel %vm935, %v2162, 0
        %v2169 = vsel %vm935, %v2164, 0
        %2171 = vmatprep.subr.bf16.mxu0 0
        %2172 = vmatpush1.bf16.xpose.msra.mxu0 0
        %2173 = vmatprep.subr.bf16.mxu0 0
        %2174 = vmatpush1.bf16.xpose.msra.mxu0 0
        %2175 = vmatprep.subr.bf16.mxu0 0
        %2176 = vmatpush1.bf16.xpose.msra.mxu0 0
        %2177 = vmatprep.subr.bf16.mxu0 0
        %2178 = vmatpush1.bf16.xpose.msra.mxu0 0
        %2179 = vmatprep.subr.bf16.mxu0 0
        %2180 = vmatpush1.bf16.xpose.msra.mxu0 0
        %2181 = vmatprep.subr.bf16.mxu0 0
        %2182 = vmatpush1.bf16.xpose.msra.mxu0 0
        %2183 = vmatprep.subr.bf16.mxu0 0
        %2184 = vmatpush1.bf16.xpose.msra.mxu0 0
        %2185 = vmatprep.subr.bf16.mxu0 0
        %2186 = vmatpush1.bf16.xpose.msra.mxu0 %v2169
        %2187 = vmatprep.subr.bf16.mxu0 0
        %2188 = vmatpush2.bf16.xpose.msra.mxu0 0
        %2189 = vmatprep.subr.bf16.mxu0 0
        %2190 = vmatpush2.bf16.xpose.msra.mxu0 0
        %2191 = vmatprep.subr.bf16.mxu0 0
        %2192 = vmatpush2.bf16.xpose.msra.mxu0 0
        %2193 = vmatprep.subr.bf16.mxu0 0
        %2194 = vmatpush2.bf16.xpose.msra.mxu0 0
        %2195 = vmatprep.subr.bf16.mxu0 0
        %2196 = vmatpush2.bf16.xpose.msra.mxu0 0
        %2197 = vmatprep.subr.bf16.mxu0 0
        %2198 = vmatpush2.bf16.xpose.msra.mxu0 0
        %2199 = vmatprep.subr.bf16.mxu0 0
        %2200 = vmatpush2.bf16.xpose.msra.mxu0 0
        %2201 = vmatprep.subr.bf16.mxu0 0
        %2202 = vmatpush2.bf16.xpose.msra.mxu0 0
        %2203 = vmatprep.mubr.bf16.mxu0 0
        %2204 = vmatmul.mubr.bf16.gmra.mxu0 %v2166
        %v2205 = vpop.f32.mrf.mxu0
        %v2206 = vadd.f32 0.0, %v2205
        %v2207 = vpop.f32.mrf.mxu0
        %v2208 = vpop.f32.mrf.mxu0
        %v2209 = vpop.f32.mrf.mxu0
        %2210 = vdwg.mxu0
        %v2211 = vsel %vm1317, %v1856, -inf
        %2212 = vmax.xlane.f32.xlu0 %v2211
        %v2213 = vpop.xlane.xlu0 %2212
        %v2214 = vsel %vm1317, %v1906, -inf
        %2215 = vmax.xlane.f32.xlu0 %v2214
        %v2216 = vpop.xlane.xlu0 %2215
        %v2217 = vsel %vm1317, %v1956, -inf
        %2218 = vmax.xlane.f32.xlu0 %v2217
        %v2219 = vpop.xlane.xlu0 %2218
        %v2220 = vsel %vm1317, %v2006, -inf
        %2221 = vmax.xlane.f32.xlu0 %v2220
        %v2222 = vpop.xlane.xlu0 %2221
        %v2223 = vsel %vm1317, %v2056, -inf
        %2224 = vmax.xlane.f32.xlu0 %v2223
        %v2225 = vpop.xlane.xlu0 %2224
        %v2226 = vsel %vm1317, %v2106, -inf
        %2227 = vmax.xlane.f32.xlu0 %v2226
        %v2228 = vpop.xlane.xlu0 %2227
        %v2229 = vsel %vm1317, %v2156, -inf
        %2230 = vmax.xlane.f32.xlu0 %v2229
        %v2231 = vpop.xlane.xlu0 %2230
        %v2232 = vsel %vm1317, %v2206, -inf
        %2233 = vmax.xlane.f32.xlu0 %v2232
        %v2234 = vpop.xlane.xlu0 %2233
        %v2235 = vsub.f32 %v1856, %v2213
        %v2236 = vsub.f32 %v1906, %v2216
        %v2237 = vsub.f32 %v1956, %v2219
        %v2238 = vsub.f32 %v2006, %v2222
        %v2239 = vsub.f32 %v2056, %v2225
        %v2240 = vsub.f32 %v2106, %v2228
        %v2241 = vsub.f32 %v2156, %v2231
        %v2242 = vsub.f32 %v2206, %v2234
        %v2243 = vmul.f32 %v2235, 1.442695
        %v2244 = vpow.pop %v2243
        %v2245 = vmul.f32 %v2236, 1.442695
        %v2246 = vpow.pop %v2245
        %v2247 = vmul.f32 %v2237, 1.442695
        %v2248 = vpow.pop %v2247
        %v2249 = vmul.f32 %v2238, 1.442695
        %v2250 = vpow.pop %v2249
        %v2251 = vmul.f32 %v2239, 1.442695
        %v2252 = vpow.pop %v2251
        %v2253 = vmul.f32 %v2240, 1.442695
        %v2254 = vpow.pop %v2253
        %v2255 = vmul.f32 %v2241, 1.442695
        %v2256 = vpow.pop %v2255
        %v2257 = vmul.f32 %v2242, 1.442695
        %v2258 = vpow.pop %v2257
        %v2259 = vsel %vm1317, %v2244, 0.0
        %2260 = vadd.xlane.f32.xlu0 %v2259
        %v2261 = vpop.xlane.xlu0 %2260
        %v2262 = vsel %vm1317, %v2246, 0.0
        %2263 = vadd.xlane.f32.xlu0 %v2262
        %v2264 = vpop.xlane.xlu0 %2263
        %v2265 = vsel %vm1317, %v2248, 0.0
        %2266 = vadd.xlane.f32.xlu0 %v2265
        %v2267 = vpop.xlane.xlu0 %2266
        %v2268 = vsel %vm1317, %v2250, 0.0
        %2269 = vadd.xlane.f32.xlu0 %v2268
        %v2270 = vpop.xlane.xlu0 %2269
        %v2271 = vsel %vm1317, %v2252, 0.0
        %2272 = vadd.xlane.f32.xlu0 %v2271
        %v2273 = vpop.xlane.xlu0 %2272
        %v2274 = vsel %vm1317, %v2254, 0.0
        %2275 = vadd.xlane.f32.xlu0 %v2274
        %v2276 = vpop.xlane.xlu0 %2275
        %v2277 = vsel %vm1317, %v2256, 0.0
        %2278 = vadd.xlane.f32.xlu0 %v2277
        %v2279 = vpop.xlane.xlu0 %2278
        %v2280 = vsel %vm1317, %v2258, 0.0
        %2281 = vadd.xlane.f32.xlu0 %v2280
        %v2282 = vpop.xlane.xlu0 %2281
        %v2283 = vrcp.pop %v2261
        %v2284 = vrcp.pop %v2264
        %v2285 = vrcp.pop %v2267
        %v2286 = vrcp.pop %v2270
        %v2287 = vrcp.pop %v2273
        %v2288 = vrcp.pop %v2276
        %v2289 = vrcp.pop %v2279
        %v2290 = vrcp.pop %v2282
        %v2291 = vmul.f32 %v2244, %v2283
        %v2292 = vmul.f32 %v2246, %v2284
        %v2293 = vmul.f32 %v2248, %v2285
        %v2294 = vmul.f32 %v2250, %v2286
        %v2295 = vmul.f32 %v2252, %v2287
        %v2296 = vmul.f32 %v2254, %v2288
        %v2297 = vmul.f32 %v2256, %v2289
        %v2298 = vmul.f32 %v2258, %v2290
        %v2299 = vpack.c.bf16 %v2291, %v2291
        %v2300 = vpack.c.bf16 %v2292, %v2292
        %v2301 = vpack.c.bf16 %v2293, %v2293
        %v2302 = vpack.c.bf16 %v2294, %v2294
        %v2303 = vpack.c.bf16 %v2295, %v2295
        %v2304 = vpack.c.bf16 %v2296, %v2296
        %v2305 = vpack.c.bf16 %v2297, %v2297
        %v2306 = vpack.c.bf16 %v2298, %v2298
        %2307 = vrot.lane.b32.xlu0 %v882, 88
        %v2308 = vpop.permute.xlu0 %2307
        %v2310 = vsel %vm1416, %v2299, 0
        %v2313 = vand.u32 %v2308, %v1423
        %2315 = vmatprep.subr.bf16.mxu0 0
        %2316 = vmatpush1.bf16.msra.mxu0 0
        %2317 = vmatprep.subr.bf16.mxu0 0
        %2318 = vmatpush1.bf16.msra.mxu0 0
        %2319 = vmatprep.subr.bf16.mxu0 0
        %2320 = vmatpush1.bf16.msra.mxu0 0
        %2321 = vmatprep.subr.bf16.mxu0 0
        %2322 = vmatpush1.bf16.msra.mxu0 0
        %2323 = vmatprep.subr.bf16.mxu0 0
        %2324 = vmatpush1.bf16.msra.mxu0 0
        %2325 = vmatprep.subr.bf16.mxu0 0
        %2326 = vmatpush1.bf16.msra.mxu0 0
        %2327 = vmatprep.subr.bf16.mxu0 0
        %2328 = vmatpush1.bf16.msra.mxu0 0
        %2329 = vmatprep.subr.bf16.mxu0 0
        %2330 = vmatpush1.bf16.msra.mxu0 %v2313
        %2331 = vmatprep.subr.bf16.mxu0 0
        %2332 = vmatpush2.bf16.msra.mxu0 0
        %2333 = vmatprep.subr.bf16.mxu0 0
        %2334 = vmatpush2.bf16.msra.mxu0 0
        %2335 = vmatprep.subr.bf16.mxu0 0
        %2336 = vmatpush2.bf16.msra.mxu0 0
        %2337 = vmatprep.subr.bf16.mxu0 0
        %2338 = vmatpush2.bf16.msra.mxu0 0
        %2339 = vmatprep.subr.bf16.mxu0 0
        %2340 = vmatpush2.bf16.msra.mxu0 0
        %2341 = vmatprep.subr.bf16.mxu0 0
        %2342 = vmatpush2.bf16.msra.mxu0 0
        %2343 = vmatprep.subr.bf16.mxu0 0
        %2344 = vmatpush2.bf16.msra.mxu0 0
        %2345 = vmatprep.subr.bf16.mxu0 0
        %2346 = vmatpush2.bf16.msra.mxu0 0
        %2347 = vmatprep.mubr.bf16.mxu0 0
        %2348 = vmatmul.mubr.bf16.gmra.mxu0 %v2310
        %v2349 = vpop.f32.mrf.mxu0
        %v2350 = vadd.f32 0.0, %v2349
        %v2351 = vpop.f32.mrf.mxu0
        %v2352 = vpop.f32.mrf.mxu0
        %v2353 = vpop.f32.mrf.mxu0
        %2354 = vdwg.mxu0
        %2355 = vrot.lane.b32.xlu0 %v893, 88
        %v2356 = vpop.permute.xlu0 %2355
        %v2358 = vsel %vm1416, %v2300, 0
        %v2361 = vand.u32 %v2356, %v1423
        %2363 = vmatprep.subr.bf16.mxu0 0
        %2364 = vmatpush1.bf16.msra.mxu0 0
        %2365 = vmatprep.subr.bf16.mxu0 0
        %2366 = vmatpush1.bf16.msra.mxu0 0
        %2367 = vmatprep.subr.bf16.mxu0 0
        %2368 = vmatpush1.bf16.msra.mxu0 0
        %2369 = vmatprep.subr.bf16.mxu0 0
        %2370 = vmatpush1.bf16.msra.mxu0 0
        %2371 = vmatprep.subr.bf16.mxu0 0
        %2372 = vmatpush1.bf16.msra.mxu0 0
        %2373 = vmatprep.subr.bf16.mxu0 0
        %2374 = vmatpush1.bf16.msra.mxu0 0
        %2375 = vmatprep.subr.bf16.mxu0 0
        %2376 = vmatpush1.bf16.msra.mxu0 0
        %2377 = vmatprep.subr.bf16.mxu0 0
        %2378 = vmatpush1.bf16.msra.mxu0 %v2361
        %2379 = vmatprep.subr.bf16.mxu0 0
        %2380 = vmatpush2.bf16.msra.mxu0 0
        %2381 = vmatprep.subr.bf16.mxu0 0
        %2382 = vmatpush2.bf16.msra.mxu0 0
        %2383 = vmatprep.subr.bf16.mxu0 0
        %2384 = vmatpush2.bf16.msra.mxu0 0
        %2385 = vmatprep.subr.bf16.mxu0 0
        %2386 = vmatpush2.bf16.msra.mxu0 0
        %2387 = vmatprep.subr.bf16.mxu0 0
        %2388 = vmatpush2.bf16.msra.mxu0 0
        %2389 = vmatprep.subr.bf16.mxu0 0
        %2390 = vmatpush2.bf16.msra.mxu0 0
        %2391 = vmatprep.subr.bf16.mxu0 0
        %2392 = vmatpush2.bf16.msra.mxu0 0
        %2393 = vmatprep.subr.bf16.mxu0 0
        %2394 = vmatpush2.bf16.msra.mxu0 0
        %2395 = vmatprep.mubr.bf16.mxu0 0
        %2396 = vmatmul.mubr.bf16.gmra.mxu0 %v2358
        %v2397 = vpop.f32.mrf.mxu0
        %v2398 = vadd.f32 0.0, %v2397
        %v2399 = vpop.f32.mrf.mxu0
        %v2400 = vpop.f32.mrf.mxu0
        %v2401 = vpop.f32.mrf.mxu0
        %2402 = vdwg.mxu0
        %2403 = vrot.lane.b32.xlu0 %v899, 88
        %v2404 = vpop.permute.xlu0 %2403
        %v2406 = vsel %vm1416, %v2301, 0
        %v2409 = vand.u32 %v2404, %v1423
        %2411 = vmatprep.subr.bf16.mxu0 0
        %2412 = vmatpush1.bf16.msra.mxu0 0
        %2413 = vmatprep.subr.bf16.mxu0 0
        %2414 = vmatpush1.bf16.msra.mxu0 0
        %2415 = vmatprep.subr.bf16.mxu0 0
        %2416 = vmatpush1.bf16.msra.mxu0 0
        %2417 = vmatprep.subr.bf16.mxu0 0
        %2418 = vmatpush1.bf16.msra.mxu0 0
        %2419 = vmatprep.subr.bf16.mxu0 0
        %2420 = vmatpush1.bf16.msra.mxu0 0
        %2421 = vmatprep.subr.bf16.mxu0 0
        %2422 = vmatpush1.bf16.msra.mxu0 0
        %2423 = vmatprep.subr.bf16.mxu0 0
        %2424 = vmatpush1.bf16.msra.mxu0 0
        %2425 = vmatprep.subr.bf16.mxu0 0
        %2426 = vmatpush1.bf16.msra.mxu0 %v2409
        %2427 = vmatprep.subr.bf16.mxu0 0
        %2428 = vmatpush2.bf16.msra.mxu0 0
        %2429 = vmatprep.subr.bf16.mxu0 0
        %2430 = vmatpush2.bf16.msra.mxu0 0
        %2431 = vmatprep.subr.bf16.mxu0 0
        %2432 = vmatpush2.bf16.msra.mxu0 0
        %2433 = vmatprep.subr.bf16.mxu0 0
        %2434 = vmatpush2.bf16.msra.mxu0 0
        %2435 = vmatprep.subr.bf16.mxu0 0
        %2436 = vmatpush2.bf16.msra.mxu0 0
        %2437 = vmatprep.subr.bf16.mxu0 0
        %2438 = vmatpush2.bf16.msra.mxu0 0
        %2439 = vmatprep.subr.bf16.mxu0 0
        %2440 = vmatpush2.bf16.msra.mxu0 0
        %2441 = vmatprep.subr.bf16.mxu0 0
        %2442 = vmatpush2.bf16.msra.mxu0 0
        %2443 = vmatprep.mubr.bf16.mxu0 0
        %2444 = vmatmul.mubr.bf16.gmra.mxu0 %v2406
        %v2445 = vpop.f32.mrf.mxu0
        %v2446 = vadd.f32 0.0, %v2445
        %v2447 = vpop.f32.mrf.mxu0
        %v2448 = vpop.f32.mrf.mxu0
        %v2449 = vpop.f32.mrf.mxu0
        %2450 = vdwg.mxu0
        %2451 = vrot.lane.b32.xlu0 %v907, 88
        %v2452 = vpop.permute.xlu0 %2451
        %v2454 = vsel %vm1416, %v2302, 0
        %v2457 = vand.u32 %v2452, %v1423
        %2459 = vmatprep.subr.bf16.mxu0 0
        %2460 = vmatpush1.bf16.msra.mxu0 0
        %2461 = vmatprep.subr.bf16.mxu0 0
        %2462 = vmatpush1.bf16.msra.mxu0 0
        %2463 = vmatprep.subr.bf16.mxu0 0
        %2464 = vmatpush1.bf16.msra.mxu0 0
        %2465 = vmatprep.subr.bf16.mxu0 0
        %2466 = vmatpush1.bf16.msra.mxu0 0
        %2467 = vmatprep.subr.bf16.mxu0 0
        %2468 = vmatpush1.bf16.msra.mxu0 0
        %2469 = vmatprep.subr.bf16.mxu0 0
        %2470 = vmatpush1.bf16.msra.mxu0 0
        %2471 = vmatprep.subr.bf16.mxu0 0
        %2472 = vmatpush1.bf16.msra.mxu0 0
        %2473 = vmatprep.subr.bf16.mxu0 0
        %2474 = vmatpush1.bf16.msra.mxu0 %v2457
        %2475 = vmatprep.subr.bf16.mxu0 0
        %2476 = vmatpush2.bf16.msra.mxu0 0
        %2477 = vmatprep.subr.bf16.mxu0 0
        %2478 = vmatpush2.bf16.msra.mxu0 0
        %2479 = vmatprep.subr.bf16.mxu0 0
        %2480 = vmatpush2.bf16.msra.mxu0 0
        %2481 = vmatprep.subr.bf16.mxu0 0
        %2482 = vmatpush2.bf16.msra.mxu0 0
        %2483 = vmatprep.subr.bf16.mxu0 0
        %2484 = vmatpush2.bf16.msra.mxu0 0
        %2485 = vmatprep.subr.bf16.mxu0 0
        %2486 = vmatpush2.bf16.msra.mxu0 0
        %2487 = vmatprep.subr.bf16.mxu0 0
        %2488 = vmatpush2.bf16.msra.mxu0 0
        %2489 = vmatprep.subr.bf16.mxu0 0
        %2490 = vmatpush2.bf16.msra.mxu0 0
        %2491 = vmatprep.mubr.bf16.mxu0 0
        %2492 = vmatmul.mubr.bf16.gmra.mxu0 %v2454
        %v2493 = vpop.f32.mrf.mxu0
        %v2494 = vadd.f32 0.0, %v2493
        %v2495 = vpop.f32.mrf.mxu0
        %v2496 = vpop.f32.mrf.mxu0
        %v2497 = vpop.f32.mrf.mxu0
        %2498 = vdwg.mxu0
        %2499 = vrot.lane.b32.xlu0 %v912, 88
        %v2500 = vpop.permute.xlu0 %2499
        %v2502 = vsel %vm1416, %v2303, 0
        %v2505 = vand.u32 %v2500, %v1423
        %2507 = vmatprep.subr.bf16.mxu0 0
        %2508 = vmatpush1.bf16.msra.mxu0 0
        %2509 = vmatprep.subr.bf16.mxu0 0
        %2510 = vmatpush1.bf16.msra.mxu0 0
        %2511 = vmatprep.subr.bf16.mxu0 0
        %2512 = vmatpush1.bf16.msra.mxu0 0
        %2513 = vmatprep.subr.bf16.mxu0 0
        %2514 = vmatpush1.bf16.msra.mxu0 0
        %2515 = vmatprep.subr.bf16.mxu0 0
        %2516 = vmatpush1.bf16.msra.mxu0 0
        %2517 = vmatprep.subr.bf16.mxu0 0
        %2518 = vmatpush1.bf16.msra.mxu0 0
        %2519 = vmatprep.subr.bf16.mxu0 0
        %2520 = vmatpush1.bf16.msra.mxu0 0
        %2521 = vmatprep.subr.bf16.mxu0 0
        %2522 = vmatpush1.bf16.msra.mxu0 %v2505
        %2523 = vmatprep.subr.bf16.mxu0 0
        %2524 = vmatpush2.bf16.msra.mxu0 0
        %2525 = vmatprep.subr.bf16.mxu0 0
        %2526 = vmatpush2.bf16.msra.mxu0 0
        %2527 = vmatprep.subr.bf16.mxu0 0
        %2528 = vmatpush2.bf16.msra.mxu0 0
        %2529 = vmatprep.subr.bf16.mxu0 0
        %2530 = vmatpush2.bf16.msra.mxu0 0
        %2531 = vmatprep.subr.bf16.mxu0 0
        %2532 = vmatpush2.bf16.msra.mxu0 0
        %2533 = vmatprep.subr.bf16.mxu0 0
        %2534 = vmatpush2.bf16.msra.mxu0 0
        %2535 = vmatprep.subr.bf16.mxu0 0
        %2536 = vmatpush2.bf16.msra.mxu0 0
        %2537 = vmatprep.subr.bf16.mxu0 0
        %2538 = vmatpush2.bf16.msra.mxu0 0
        %2539 = vmatprep.mubr.bf16.mxu0 0
        %2540 = vmatmul.mubr.bf16.gmra.mxu0 %v2502
        %v2541 = vpop.f32.mrf.mxu0
        %v2542 = vadd.f32 0.0, %v2541
        %v2543 = vpop.f32.mrf.mxu0
        %v2544 = vpop.f32.mrf.mxu0
        %v2545 = vpop.f32.mrf.mxu0
        %2546 = vdwg.mxu0
        %2547 = vrot.lane.b32.xlu0 %v920, 88
        %v2548 = vpop.permute.xlu0 %2547
        %v2550 = vsel %vm1416, %v2304, 0
        %v2553 = vand.u32 %v2548, %v1423
        %2555 = vmatprep.subr.bf16.mxu0 0
        %2556 = vmatpush1.bf16.msra.mxu0 0
        %2557 = vmatprep.subr.bf16.mxu0 0
        %2558 = vmatpush1.bf16.msra.mxu0 0
        %2559 = vmatprep.subr.bf16.mxu0 0
        %2560 = vmatpush1.bf16.msra.mxu0 0
        %2561 = vmatprep.subr.bf16.mxu0 0
        %2562 = vmatpush1.bf16.msra.mxu0 0
        %2563 = vmatprep.subr.bf16.mxu0 0
        %2564 = vmatpush1.bf16.msra.mxu0 0
        %2565 = vmatprep.subr.bf16.mxu0 0
        %2566 = vmatpush1.bf16.msra.mxu0 0
        %2567 = vmatprep.subr.bf16.mxu0 0
        %2568 = vmatpush1.bf16.msra.mxu0 0
        %2569 = vmatprep.subr.bf16.mxu0 0
        %2570 = vmatpush1.bf16.msra.mxu0 %v2553
        %2571 = vmatprep.subr.bf16.mxu0 0
        %2572 = vmatpush2.bf16.msra.mxu0 0
        %2573 = vmatprep.subr.bf16.mxu0 0
        %2574 = vmatpush2.bf16.msra.mxu0 0
        %2575 = vmatprep.subr.bf16.mxu0 0
        %2576 = vmatpush2.bf16.msra.mxu0 0
        %2577 = vmatprep.subr.bf16.mxu0 0
        %2578 = vmatpush2.bf16.msra.mxu0 0
        %2579 = vmatprep.subr.bf16.mxu0 0
        %2580 = vmatpush2.bf16.msra.mxu0 0
        %2581 = vmatprep.subr.bf16.mxu0 0
        %2582 = vmatpush2.bf16.msra.mxu0 0
        %2583 = vmatprep.subr.bf16.mxu0 0
        %2584 = vmatpush2.bf16.msra.mxu0 0
        %2585 = vmatprep.subr.bf16.mxu0 0
        %2586 = vmatpush2.bf16.msra.mxu0 0
        %2587 = vmatprep.mubr.bf16.mxu0 0
        %2588 = vmatmul.mubr.bf16.gmra.mxu0 %v2550
        %v2589 = vpop.f32.mrf.mxu0
        %v2590 = vadd.f32 0.0, %v2589
        %v2591 = vpop.f32.mrf.mxu0
        %v2592 = vpop.f32.mrf.mxu0
        %v2593 = vpop.f32.mrf.mxu0
        %2594 = vdwg.mxu0
        %2595 = vrot.lane.b32.xlu0 %v925, 88
        %v2596 = vpop.permute.xlu0 %2595
        %v2598 = vsel %vm1416, %v2305, 0
        %v2601 = vand.u32 %v2596, %v1423
        %2603 = vmatprep.subr.bf16.mxu0 0
        %2604 = vmatpush1.bf16.msra.mxu0 0
        %2605 = vmatprep.subr.bf16.mxu0 0
        %2606 = vmatpush1.bf16.msra.mxu0 0
        %2607 = vmatprep.subr.bf16.mxu0 0
        %2608 = vmatpush1.bf16.msra.mxu0 0
        %2609 = vmatprep.subr.bf16.mxu0 0
        %2610 = vmatpush1.bf16.msra.mxu0 0
        %2611 = vmatprep.subr.bf16.mxu0 0
        %2612 = vmatpush1.bf16.msra.mxu0 0
        %2613 = vmatprep.subr.bf16.mxu0 0
        %2614 = vmatpush1.bf16.msra.mxu0 0
        %2615 = vmatprep.subr.bf16.mxu0 0
        %2616 = vmatpush1.bf16.msra.mxu0 0
        %2617 = vmatprep.subr.bf16.mxu0 0
        %2618 = vmatpush1.bf16.msra.mxu0 %v2601
        %2619 = vmatprep.subr.bf16.mxu0 0
        %2620 = vmatpush2.bf16.msra.mxu0 0
        %2621 = vmatprep.subr.bf16.mxu0 0
        %2622 = vmatpush2.bf16.msra.mxu0 0
        %2623 = vmatprep.subr.bf16.mxu0 0
        %2624 = vmatpush2.bf16.msra.mxu0 0
        %2625 = vmatprep.subr.bf16.mxu0 0
        %2626 = vmatpush2.bf16.msra.mxu0 0
        %2627 = vmatprep.subr.bf16.mxu0 0
        %2628 = vmatpush2.bf16.msra.mxu0 0
        %2629 = vmatprep.subr.bf16.mxu0 0
        %2630 = vmatpush2.bf16.msra.mxu0 0
        %2631 = vmatprep.subr.bf16.mxu0 0
        %2632 = vmatpush2.bf16.msra.mxu0 0
        %2633 = vmatprep.subr.bf16.mxu0 0
        %2634 = vmatpush2.bf16.msra.mxu0 0
        %2635 = vmatprep.mubr.bf16.mxu0 0
        %2636 = vmatmul.mubr.bf16.gmra.mxu0 %v2598
        %v2637 = vpop.f32.mrf.mxu0
        %v2638 = vadd.f32 0.0, %v2637
        %v2639 = vpop.f32.mrf.mxu0
        %v2640 = vpop.f32.mrf.mxu0
        %v2641 = vpop.f32.mrf.mxu0
        %2642 = vdwg.mxu0
        %2643 = vrot.lane.b32.xlu0 %v932, 88
        %v2644 = vpop.permute.xlu0 %2643
        %v2646 = vsel %vm1416, %v2306, 0
        %v2649 = vand.u32 %v2644, %v1423
        %2651 = vmatprep.subr.bf16.mxu0 0
        %2652 = vmatpush1.bf16.msra.mxu0 0
        %2653 = vmatprep.subr.bf16.mxu0 0
        %2654 = vmatpush1.bf16.msra.mxu0 0
        %2655 = vmatprep.subr.bf16.mxu0 0
        %2656 = vmatpush1.bf16.msra.mxu0 0
        %2657 = vmatprep.subr.bf16.mxu0 0
        %2658 = vmatpush1.bf16.msra.mxu0 0
        %2659 = vmatprep.subr.bf16.mxu0 0
        %2660 = vmatpush1.bf16.msra.mxu0 0
        %2661 = vmatprep.subr.bf16.mxu0 0
        %2662 = vmatpush1.bf16.msra.mxu0 0
        %2663 = vmatprep.subr.bf16.mxu0 0
        %2664 = vmatpush1.bf16.msra.mxu0 0
        %2665 = vmatprep.subr.bf16.mxu0 0
        %2666 = vmatpush1.bf16.msra.mxu0 %v2649
        %2667 = vmatprep.subr.bf16.mxu0 0
        %2668 = vmatpush2.bf16.msra.mxu0 0
        %2669 = vmatprep.subr.bf16.mxu0 0
        %2670 = vmatpush2.bf16.msra.mxu0 0
        %2671 = vmatprep.subr.bf16.mxu0 0
        %2672 = vmatpush2.bf16.msra.mxu0 0
        %2673 = vmatprep.subr.bf16.mxu0 0
        %2674 = vmatpush2.bf16.msra.mxu0 0
        %2675 = vmatprep.subr.bf16.mxu0 0
        %2676 = vmatpush2.bf16.msra.mxu0 0
        %2677 = vmatprep.subr.bf16.mxu0 0
        %2678 = vmatpush2.bf16.msra.mxu0 0
        %2679 = vmatprep.subr.bf16.mxu0 0
        %2680 = vmatpush2.bf16.msra.mxu0 0
        %2681 = vmatprep.subr.bf16.mxu0 0
        %2682 = vmatpush2.bf16.msra.mxu0 0
        %2683 = vmatprep.mubr.bf16.mxu0 0
        %2684 = vmatmul.mubr.bf16.gmra.mxu0 %v2646
        %v2685 = vpop.f32.mrf.mxu0
        %v2686 = vadd.f32 0.0, %v2685
        %v2687 = vpop.f32.mrf.mxu0
        %v2688 = vpop.f32.mrf.mxu0
        %v2689 = vpop.f32.mrf.mxu0
        %2690 = vdwg.mxu0
        %v2691 = vpack.c.bf16 %v2350, %v2350
        %v2692 = vpack.c.bf16 %v2398, %v2398
        %v2693 = vpack.c.bf16 %v2446, %v2446
        %v2694 = vpack.c.bf16 %v2494, %v2494
        %v2695 = vpack.c.bf16 %v2542, %v2542
        %v2696 = vpack.c.bf16 %v2590, %v2590
        %v2697 = vpack.c.bf16 %v2638, %v2638
        %v2698 = vpack.c.bf16 %v2686, %v2686
        %2707 = vrot.lane.b32.xlu0 %v2691, 8
        %v2708 = vpop.permute.xlu0 %2707
        %2709 = vrot.lane.b32.xlu0 %v2692, 8
        %v2710 = vpop.permute.xlu0 %2709
        %2711 = vrot.lane.b32.xlu0 %v2693, 8
        %v2712 = vpop.permute.xlu0 %2711
        %2713 = vrot.lane.b32.xlu0 %v2694, 8
        %v2714 = vpop.permute.xlu0 %2713
        %2715 = vrot.lane.b32.xlu0 %v2695, 8
        %v2716 = vpop.permute.xlu0 %2715
        %2717 = vrot.lane.b32.xlu0 %v2696, 8
        %v2718 = vpop.permute.xlu0 %2717
        %2719 = vrot.lane.b32.xlu0 %v2697, 8
        %v2720 = vpop.permute.xlu0 %2719
        %2721 = vrot.lane.b32.xlu0 %v2698, 8
        %v2722 = vpop.permute.xlu0 %2721
        %v2725 = vsel %vm935, %v1803, %v2708
        %v2729 = vsel %vm935, %v1804, %v2710
        %v2732 = vsel %vm935, %v1805, %v2712
        %v2735 = vsel %vm935, %v1806, %v2714
        %v2738 = vsel %vm935, %v1807, %v2716
        %v2741 = vsel %vm935, %v1808, %v2718
        %v2744 = vsel %vm935, %v1809, %v2720
        %v2747 = vsel %vm935, %v1810, %v2722
        %v2748 = vshrl.u32 %v2729, 16
        %v2750 = vrot.slane %v2748, 4
        %v2751 = vshll.u32 %v2729, 16
        %v2753 = vrot.slane %v2751, 5
        %v2754 = vor.u32 %v2750, %v2753
        %v2757 = vrot.slane %v2732, 1
        %v2759 = vshrl.u32 %v2735, 16
        %v2761 = vrot.slane %v2759, 5
        %v2762 = vshll.u32 %v2735, 16
        %v2764 = vrot.slane %v2762, 6
        %v2765 = vor.u32 %v2761, %v2764
        %v2768 = vrot.slane %v2738, 2
        %v2770 = vshrl.u32 %v2741, 16
        %v2772 = vrot.slane %v2770, 6
        %v2773 = vshll.u32 %v2741, 16
        %v2775 = vrot.slane %v2773, 7
        %v2776 = vor.u32 %v2772, %v2775
        %v2779 = vrot.slane %v2744, 3
        %v2781 = vshrl.u32 %v2747, 16
        %v2783 = vrot.slane %v2781, 7
        %v2784 = vshll.u32 %v2747, 16
        %v2786 = vor.u32 %v2783, %v2784
        %vm2788 = vcmask 1043456
        %vm2789 = vsmask.f32 3328
        %vm2790 = vmand %vm2788, %vm2789
        %v2791 = vsel %vm2790, %v2725, %v2754
        %vm2792 = vcmask 1046528
        %v2795 = vsel %vm2792, %v2791, %v2757
        %vm2796 = vsmask.f32 2304
        %vm2797 = vmand %vm922, %vm2796
        %v2798 = vsel %vm2797, %v2757, %v2765
        %vm2799 = vcmask 1045504
        %v2802 = vsel %vm2799, %v2798, %v2768
        %vm2803 = vsmask.f32 1280
        %vm2804 = vmand %vm909, %vm2803
        %v2805 = vsel %vm2804, %v2768, %v2776
        %vm2806 = vcmask 1044480
        %v2809 = vsel %vm2806, %v2805, %v2779
        %vm2810 = vsmask.f32 256
        %vm2811 = vmand %vm896, %vm2810
        %v2812 = vsel %vm2811, %v2779, %v2786
        %2814 = vset.pattern.permute.xlu0 0
        %2815 = vperm.xlu0 %2814, %v757
        %v2816 = vpop.permute.xlu0 %2815
        %2819 = vset.pattern.permute.xlu0 0
        %2820 = vperm.xlu0 %2819, %v758
        %v2821 = vpop.permute.xlu0 %2820
        %2824 = vset.pattern.permute.xlu0 0
        %2825 = vperm.xlu0 %2824, %v759
        %v2826 = vpop.permute.xlu0 %2825
        %2829 = vset.pattern.permute.xlu0 0
        %2830 = vperm.xlu0 %2829, %v760
        %v2831 = vpop.permute.xlu0 %2830
        %v2837 = vunpack.c.l.b16 %v753
        %v2838 = vunpack.c.l.b16 %v754
        %v2839 = vunpack.c.l.b16 %v755
        %v2840 = vunpack.c.l.b16 %v756
        %v2841 = vpack.c.b16 %v2838, %v2837
        %v2842 = vpack.c.b16 %v2840, %v2839
        %vm2843 = vcmask 130048
        %v2845 = vsel %vm2843, %v2841, 0
        %v2848 = vsel %vm2843, %v2842, 0
        %v2850 = vsel %vm2843, %v2795, 0
        %v2852 = vsel %vm2843, %v2802, 0
        %v2854 = vsel %vm2843, %v2809, 0
        %v2857 = vsel %vm2843, %v2812, 0
        %2859 = vmatprep.subr.bf16.mxu0 0
        %2860 = vmatpush1.bf16.xpose.msra.mxu0 0
        %2861 = vmatprep.subr.bf16.mxu0 0
        %2862 = vmatpush1.bf16.xpose.msra.mxu0 0
        %2863 = vmatprep.subr.bf16.mxu0 0
        %2864 = vmatpush1.bf16.xpose.msra.mxu0 0
        %2865 = vmatprep.subr.bf16.mxu0 0
        %2866 = vmatpush1.bf16.xpose.msra.mxu0 0
        %2867 = vmatprep.subr.bf16.mxu0 0
        %2868 = vmatpush1.bf16.xpose.msra.mxu0 %v2857
        %2869 = vmatprep.subr.bf16.mxu0 0
        %2870 = vmatpush1.bf16.xpose.msra.mxu0 %v2854
        %2871 = vmatprep.subr.bf16.mxu0 0
        %2872 = vmatpush1.bf16.xpose.msra.mxu0 %v2852
        %2873 = vmatprep.subr.bf16.mxu0 0
        %2874 = vmatpush1.bf16.xpose.msra.mxu0 %v2850
        %2875 = vmatprep.subr.bf16.mxu0 0
        %2876 = vmatpush2.bf16.xpose.msra.mxu0 0
        %2877 = vmatprep.subr.bf16.mxu0 0
        %2878 = vmatpush2.bf16.xpose.msra.mxu0 0
        %2879 = vmatprep.subr.bf16.mxu0 0
        %2880 = vmatpush2.bf16.xpose.msra.mxu0 0
        %2881 = vmatprep.subr.bf16.mxu0 0
        %2882 = vmatpush2.bf16.xpose.msra.mxu0 0
        %2883 = vmatprep.subr.bf16.mxu0 0
        %2884 = vmatpush2.bf16.xpose.msra.mxu0 0
        %2885 = vmatprep.subr.bf16.mxu0 0
        %2886 = vmatpush2.bf16.xpose.msra.mxu0 0
        %2887 = vmatprep.subr.bf16.mxu0 0
        %2888 = vmatpush2.bf16.xpose.msra.mxu0 0
        %2889 = vmatprep.subr.bf16.mxu0 0
        %2890 = vmatpush2.bf16.xpose.msra.mxu0 0
        %2891 = vmatprep.mubr.bf16.mxu0 0
        %2892 = vmatmul.mubr.bf16.gmra.mxu0 %v2845
        %v2893 = vpop.f32.mrf.mxu0
        %v2894 = vadd.f32 %v2816, %v2893
        %v2895 = vpop.f32.mrf.mxu0
        %v2896 = vpop.f32.mrf.mxu0
        %v2897 = vadd.f32 %v2821, %v2896
        %v2898 = vpop.f32.mrf.mxu0
        %2899 = vmatprep.mubr.bf16.mxu0 0
        %2900 = vmatmul.mubr.bf16.gmra.mxu0 %v2848
        %v2901 = vpop.f32.mrf.mxu0
        %v2902 = vadd.f32 %v2826, %v2901
        %v2903 = vpop.f32.mrf.mxu0
        %v2904 = vpop.f32.mrf.mxu0
        %v2905 = vadd.f32 %v2831, %v2904
        %v2906 = vpop.f32.mrf.mxu0
        %2907 = vdwg.mxu0
        %vm2908 = vcmask 457728
        %2909 = vst.msk [vmem:[%s308] sm:$0xff] %vm2908, %v2894
        %2910 = vst.msk [vmem:[%s308 + $0x8] sm:$0xff] %vm2908, %v2897
        %2911 = vst.msk [vmem:[%s308 + $0x10] sm:$0xff] %vm2908, %v2902
        %2912 = vst.msk [vmem:[%s308 + $0x18] sm:$0xff] %vm2908, %v2905
        %s2913 = sand.u32 %s189, 1
        %s2914 = scalar_lea.sflag [#allocation18], %s2913
        %s2915 = sand.u32 %s189, 1
        %s2916 = smul.addr %s2915, 32
        %s2917 = scalar_lea.vmem [#allocation17], %s2916
        // Predicated region
        $region45: #{local_attention.2} parent=43 // pred_check
          %p2918 = pneg %p199
        $region46: #{local_attention.2} parent=43 // pred_check_branch
          %2920 = sbr.rel (%p2918) target = $region48
        $region47: #{local_attention.2} parent=43 // pred_region
          %s2922 = ssub.s32 512, 512
          %2923 = vsyncadd %s2914, %s2922
          %s2924 = smul.addr %s36, 4
          %s2925 = smul.addr %s2924, 128
          %s2926 = scalar_lea.hbm %s7, %s2925
          %s2927 = sshll.u32 %s2917, 4
          %s2928 = int_to_ptr.vmem [resolvable:$true] %s2927
          %2933 = dma.vmem_to_hbm [thread:$0]  %s2928, 512, %s2926, %s2914, 128, 128, 8
        $region48: #{local_attention.2} parent=43 // pred_fallthru
          _
      $region44: #{local_attention.2} parent=5 // pred_fallthru
        _
      %p2934 = scmp.le.s32.totalorder 2, %s31
      // Predicated region
      $region49: #{local_attention.2} parent=5 // pred_check
        %p2935 = pneg %p2934
      $region50: #{local_attention.2} parent=5 // pred_check_branch
        %2937 = sbr.rel (%p2935) target = $region52
      $region51: #{local_attention.2} parent=5 // pred_region
        %s2938 = ssub.s32 %s31, 2
        // Predicated region
        $region53: #{local_attention.2} parent=51 // pred_check
          %p2939 = pneg %p205
        $region54: #{local_attention.2} parent=51 // pred_check_branch
          %2941 = sbr.rel (%p2939) target = $region56
        $region55: #{local_attention.2} parent=51 // pred_region
          %s2942 = sand.u32 %s190, 1
          %s2943 = scalar_lea.sflag [#allocation18], %s2942
          %s2944 = sand.u32 %s190, 1
          %s2945 = smul.addr %s2944, 32
          %s2946 = scalar_lea.vmem [#allocation17], %s2945
          %2947 = dma.done %s2943, 512
        $region56: #{local_attention.2} parent=51 // pred_fallthru
          _
      $region52: #{local_attention.2} parent=5 // pred_fallthru
        _
    $region6: #{local_attention.2} parent=1 // loop_footer
      %s35 = sadd.s32 1, %s31
    $region7: #{local_attention.2} parent=1 // loop_footer_branch
      %30 = sbr.rel target = $region3
    $region8: #{local_attention.2} parent=1 // loop_exit
      _
    %2948 = vsyncpa [#allocation18], 1
    %s2949 = scalar_lea.sflag [#allocation18], 1
    %2950 = vsyncpa %s2949, 1

</llo_original>
